<compile_context>
chip_gen: v6e
topology: v6e:2x2x1
jax: 0.10.0
libtpu: 0.0.40
codegen_flags: <defaults>
</compile_context>

<pallas_src>
import functools

import jax
import jax.numpy as jnp
from jax.experimental import pallas as pl
from jax.experimental.pallas import tpu as pltpu


def _rup(x, m):
    return ((x + m - 1) // m) * m


def _conv_kernel(*refs, kh, kw, Wp, TM, TB, relu, has_bias):
    """One grid step = TM dense (stride-1) output rows of one image.

    x0_ref : (1, TM, Cin)        bf16  main block of flattened padded rows
    x1_ref : (1, TB, Cin)        bf16  halo rows immediately after the block
    w_ref  : (kh*kw*Cin, Cpad)   bf16  folded weights (K = kh*kw*Cin)
    b_ref  : (1, Cpad)           f32   (only when has_bias)
    o_ref  : (1, TM, Cpad)       bf16  dense output rows (lane-dense store)
    win_ref: (TM+TB, Cin)        bf16  VMEM scratch: stitched row window
    """
    if has_bias:
        x0_ref, x1_ref, w_ref, b_ref, o_ref, win_ref = refs
    else:
        x0_ref, x1_ref, w_ref, o_ref, win_ref = refs
        b_ref = None

    # Stitch main block + halo rows into one contiguous row window (aligned
    # sublane stores: offsets 0 and TM are multiples of 16).
    win_ref[pl.ds(0, TM), :] = x0_ref[0]
    win_ref[pl.ds(TM, TB), :] = x1_ref[0]

    # im2col LHS: fold all kh*kw taps into the contraction dimension so the
    # MXU sees one matmul with K = kh*kw*Cin instead of kh*kw K=Cin matmuls
    # plus VPU adds.  Concat is done in f32 (exact for bf16 data) and cast
    # back to bf16 for the MXU.
    taps = []
    for i in range(kh):
        for j in range(kw):
            off = i * Wp + j                       # static row shift of tap (i, j)
            taps.append(win_ref[pl.ds(off, TM), :].astype(jnp.float32))
    lhs = taps[0] if len(taps) == 1 else jnp.concatenate(taps, axis=-1)
    lhs = lhs.astype(jnp.bfloat16)                 # (TM, kh*kw*Cin)

    acc = jnp.dot(lhs, w_ref[...], preferred_element_type=jnp.float32)
    if has_bias:
        acc = acc + b_ref[...]                     # broadcast over rows
    if relu:
        acc = jnp.where(acc > 0, acc, jnp.float32(0.2) * acc)   # LeakyReLU(0.2)
    o_ref[0] = acc.astype(o_ref.dtype)


@functools.partial(jax.jit, static_argnames=("stride", "relu"))
def basic_conv(x_nchw, weight, bias=None, *, stride=1, relu=True):
    """Forward of BasicConv (Conv2d + optional bias + LeakyReLU(0.2))."""
    N, Cin, H, W = x_nchw.shape
    Cout, Cin_w, kh, kw = weight.shape
    assert Cin == Cin_w
    pad_h, pad_w = kh // 2, kw // 2

    # ---- wrapper glue: NCHW -> NHWC, zero-pad, flatten padded rows ----
    x = jnp.transpose(x_nchw, (0, 2, 3, 1)).astype(jnp.bfloat16)
    xp = jnp.pad(x, ((0, 0), (pad_h, pad_h), (pad_w, pad_w), (0, 0)))
    Hp, Wp = H + 2 * pad_h, W + 2 * pad_w
    Hd, Wd = Hp - kh + 1, Wp - kw + 1              # dense (stride-1) output grid
    Ho = (H + 2 * pad_h - kh) // stride + 1
    Wo = (W + 2 * pad_w - kw) // stride + 1

    # Dense output row q = a*Wp + b reads padded flat rows q + i*Wp + j for
    # tap (i, j); columns b >= Wd are junk and are sliced away below.
    Mq = Hd * Wp                                   # dense output rows per image
    halo = (kh - 1) * Wp + (kw - 1)                # extra rows the taps reach
    KK = kh * kw * Cin                             # folded contraction dim
    Cpad = max(128, _rup(Cout, 128))               # lane-dense output channels

    # ---- generation-aware tiling / VMEM budget ----
    try:
        vmem_cap = int(pltpu.get_tpu_info().vmem_capacity_bytes)
    except Exception:
        vmem_cap = 64 << 20                        # conservative (v7x) default
    budget = min((vmem_cap * 3) // 4, 100 << 20)

    TB = max(16, _rup(halo, 16))                   # halo-block rows (bf16 tile aligned)
    lane_cin = _rup(Cin, 128)
    lane_kk = _rup(KK, 128)
    per_row = (2 * lane_cin * 2                    # main x block, double-buffered bf16
               + 2 * Cpad * 2                      # out block, double-buffered bf16
               + lane_cin * 2                      # window scratch
               + lane_kk * 2                       # folded im2col LHS temp
               + Cpad * 4)                         # f32 accumulator temp
    fixed = (2 * _rup(KK, 16) * Cpad * 2           # weights (double-buffered)
             + 2 * TB * lane_cin * 2               # halo block, double-buffered
             + TB * lane_cin * 2                   # halo part of window scratch
             + (2 * 16 * Cpad * 4 if bias is not None else 0)
             + (4 << 20))                          # compiler-internal headroom
    rows_cap = max(TB, (budget - fixed) // per_row)
    r = max(1, min(rows_cap, 4096) // TB)
    r = min(r, -(-Mq // TB))                       # no more rows than the image needs
    TM = r * TB                                    # output rows per grid step
    num_m = -(-Mq // TM)
    Lpad = num_m * TM + TB                         # flat rows the kernel may read
    est = fixed + TM * per_row
    vmem_limit = int(min(max(budget, est), 120 << 20))

    xf = xp.reshape(N, Hp * Wp, Cin)
    xf = jnp.pad(xf, ((0, 0), (0, Lpad - Hp * Wp), (0, 0)))

    # Weights: (Cout, Cin, kh, kw) -> (kh*kw*Cin, Cpad); K order = (i, j, c)
    # matching the in-kernel tap concatenation order.
    wm = jnp.transpose(weight, (2, 3, 1, 0)).reshape(KK, Cout)
    wm = jnp.pad(wm, ((0, 0), (0, Cpad - Cout))).astype(jnp.bfloat16)

    has_bias = bias is not None
    inputs = [xf, xf, wm]
    in_specs = [
        pl.BlockSpec((1, TM, Cin), lambda n, m: (n, m, 0)),
        pl.BlockSpec((1, TB, Cin), lambda n, m: (n, (m + 1) * r, 0)),
        pl.BlockSpec((KK, Cpad), lambda n, m: (0, 0)),
    ]
    if has_bias:
        b2 = jnp.pad(bias.reshape(1, Cout).astype(jnp.float32),
                     ((0, 0), (0, Cpad - Cout)))
        inputs.append(b2)
        in_specs.append(pl.BlockSpec((1, Cpad), lambda n, m: (0, 0)))

    out = pl.pallas_call(
        functools.partial(_conv_kernel, kh=kh, kw=kw, Wp=Wp, TM=TM, TB=TB,
                          relu=relu, has_bias=has_bias),
        out_shape=jax.ShapeDtypeStruct((N, num_m * TM, Cpad), jnp.bfloat16),
        grid_spec=pltpu.PrefetchScalarGridSpec(
            num_scalar_prefetch=0,
            grid=(N, num_m),
            in_specs=in_specs,
            out_specs=pl.BlockSpec((1, TM, Cpad), lambda n, m: (n, m, 0)),
            scratch_shapes=[pltpu.VMEM((TM + TB, Cin), jnp.bfloat16)],
        ),
        compiler_params=pltpu.CompilerParams(
            dimension_semantics=("parallel", "parallel"),
            vmem_limit_bytes=vmem_limit),
    )(*inputs)

    # ---- wrapper glue: keep valid rows/cols, stride subsample, back to NCHW ----
    y = out[:, :Mq, :Cout].reshape(N, Hd, Wp, Cout)
    y = y[:, ::stride, ::stride, :][:, :Ho, :Wo, :]
    return jnp.transpose(y, (0, 3, 1, 2)).astype(jnp.float32)


def _reference(x_nchw, weight, bias=None, *, stride=1, relu=True):
    # Reference on the same bf16-rounded inputs (kernel uses bf16 operands
    # with f32 accumulation), full-precision accumulation.
    xb = x_nchw.astype(jnp.bfloat16).astype(jnp.float32)
    wb = weight.astype(jnp.bfloat16).astype(jnp.float32)
    pad_h, pad_w = weight.shape[2] // 2, weight.shape[3] // 2
    y = jax.lax.conv_general_dilated(
        xb, wb, window_strides=(stride, stride),
        padding=[(pad_h, pad_h), (pad_w, pad_w)],
        dimension_numbers=("NCHW", "OIHW", "NCHW"),
        precision=jax.lax.Precision.HIGHEST)
    if bias is not None:
        y = y + bias.reshape(1, -1, 1, 1)
    if relu:
        y = jnp.where(y > 0, y, 0.2 * y)
    return y


if __name__ == "__main__":
    key = jax.random.PRNGKey(0)
    kx, kw_, kb = jax.random.split(key, 3)

    # BasicConv(in_channel=4, out_channel=8, kernel_size=3, stride=1)
    N, Cin, H, W = 2, 4, 16, 16
    Cout, ksize = 8, 3

    x = jax.random.normal(kx, (N, Cin, H, W), dtype=jnp.float32)
    weight = jax.random.normal(kw_, (Cout, Cin, ksize, ksize), dtype=jnp.float32) * 0.1

    # Default module config: bias=False, norm=False, relu=True, stride=1.
    y = basic_conv(x, weight, bias=None, stride=1, relu=True)
    y = jax.block_until_ready(y)
    y_ref = _reference(x, weight, bias=None, stride=1, relu=True)
    assert y.shape == (N, Cout, H, W), y.shape
    err = float(jnp.max(jnp.abs(y - y_ref)))
    assert err < 6e-2, err

    # bias=True, stride=2 variant (exercises the bias add + strided output path).
    bias = jax.random.normal(kb, (Cout,), dtype=jnp.float32) * 0.1
    y2 = basic_conv(x, weight, bias, stride=2, relu=True)
    y2 = jax.block_until_ready(y2)
    y2_ref = _reference(x, weight, bias, stride=2, relu=True)
    assert y2.shape == y2_ref.shape, (y2.shape, y2_ref.shape)
    err2 = float(jnp.max(jnp.abs(y2 - y2_ref)))
    assert err2 < 6e-2, err2

    print("KERNEL_OK")
</pallas_src>

<mosaic_0001>
module attributes {stable_mosaic.version = 11 : i64} {
  func.func @_conv_kernel(%arg0: i32, %arg1: i32, %arg2: memref<1x288x4xbf16, #tpu.memory_space<vmem>>, %arg3: memref<1x48x4xbf16, #tpu.memory_space<vmem>>, %arg4: memref<36x128xbf16, #tpu.memory_space<vmem>>, %arg5: memref<1x288x128xbf16, #tpu.memory_space<vmem>>, %arg6: memref<336x4xbf16, #tpu.memory_space<vmem>>) attributes {dimension_semantics = [#tpu.dimension_semantics<parallel>, #tpu.dimension_semantics<parallel>], iteration_bounds = array<i64: 2, 1>, scalar_prefetch = 0 : i64, scratch_operands = 1 : i64, tpu.core_type = #tpu.core_type<tc>, window_params = [{transform_indices = @transform_0, window_bounds = array<i64: 1, 288, 4>}, {transform_indices = @transform_1, window_bounds = array<i64: 1, 48, 4>}, {pipeline_mode = #tpu.pipeline_mode<synchronous>, transform_indices = @transform_2, window_bounds = array<i64: 36, 128>}, {transform_indices = @transform_3, window_bounds = array<i64: 1, 288, 128>}]} {
    %c0 = arith.constant 0 : index
    %c0_0 = arith.constant 0 : index
    %c0_1 = arith.constant 0 : index
    %0 = vector.load %arg2[%c0, %c0_0, %c0_1] : memref<1x288x4xbf16, #tpu.memory_space<vmem>>, vector<1x288x4xbf16>
    %1 = vector.shape_cast %0 : vector<1x288x4xbf16> to vector<288x4xbf16>
    %c0_2 = arith.constant 0 : index
    %c0_3 = arith.constant 0 : index
    %2 = vector.load %arg6[%c0_2, %c0_3] : memref<336x4xbf16, #tpu.memory_space<vmem>>, vector<288x4xbf16>
    tpu.vector_store %arg6[%c0_2, %c0_3], %1 {strides = array<i32>} : memref<336x4xbf16, #tpu.memory_space<vmem>>, vector<288x4xbf16>,
    %c0_4 = arith.constant 0 : index
    %c0_5 = arith.constant 0 : index
    %c0_6 = arith.constant 0 : index
    %3 = vector.load %arg3[%c0_4, %c0_5, %c0_6] : memref<1x48x4xbf16, #tpu.memory_space<vmem>>, vector<1x48x4xbf16>
    %4 = vector.shape_cast %3 : vector<1x48x4xbf16> to vector<48x4xbf16>
    %c288 = arith.constant 288 : index
    %c0_7 = arith.constant 0 : index
    %5 = vector.load %arg6[%c288, %c0_7] : memref<336x4xbf16, #tpu.memory_space<vmem>>, vector<48x4xbf16>
    tpu.vector_store %arg6[%c288, %c0_7], %4 {strides = array<i32>} : memref<336x4xbf16, #tpu.memory_space<vmem>>, vector<48x4xbf16>,
    %c0_8 = arith.constant 0 : index
    %c0_9 = arith.constant 0 : index
    %6 = vector.load %arg6[%c0_8, %c0_9] : memref<336x4xbf16, #tpu.memory_space<vmem>>, vector<288x4xbf16>
    %7 = arith.extf %6 : vector<288x4xbf16> to vector<288x4xf32>
    %c1 = arith.constant 1 : index
    %c0_10 = arith.constant 0 : index
    %8 = vector.load %arg6[%c1, %c0_10] : memref<336x4xbf16, #tpu.memory_space<vmem>>, vector<288x4xbf16>
    %9 = arith.extf %8 : vector<288x4xbf16> to vector<288x4xf32>
    %c2 = arith.constant 2 : index
    %c0_11 = arith.constant 0 : index
    %10 = vector.load %arg6[%c2, %c0_11] : memref<336x4xbf16, #tpu.memory_space<vmem>>, vector<288x4xbf16>
    %11 = arith.extf %10 : vector<288x4xbf16> to vector<288x4xf32>
    %c18 = arith.constant 18 : index
    %c0_12 = arith.constant 0 : index
    %12 = vector.load %arg6[%c18, %c0_12] : memref<336x4xbf16, #tpu.memory_space<vmem>>, vector<288x4xbf16>
    %13 = arith.extf %12 : vector<288x4xbf16> to vector<288x4xf32>
    %c19 = arith.constant 19 : index
    %c0_13 = arith.constant 0 : index
    %14 = vector.load %arg6[%c19, %c0_13] : memref<336x4xbf16, #tpu.memory_space<vmem>>, vector<288x4xbf16>
    %15 = arith.extf %14 : vector<288x4xbf16> to vector<288x4xf32>
    %c20 = arith.constant 20 : index
    %c0_14 = arith.constant 0 : index
    %16 = vector.load %arg6[%c20, %c0_14] : memref<336x4xbf16, #tpu.memory_space<vmem>>, vector<288x4xbf16>
    %17 = arith.extf %16 : vector<288x4xbf16> to vector<288x4xf32>
    %c36 = arith.constant 36 : index
    %c0_15 = arith.constant 0 : index
    %18 = vector.load %arg6[%c36, %c0_15] : memref<336x4xbf16, #tpu.memory_space<vmem>>, vector<288x4xbf16>
    %19 = arith.extf %18 : vector<288x4xbf16> to vector<288x4xf32>
    %c37 = arith.constant 37 : index
    %c0_16 = arith.constant 0 : index
    %20 = vector.load %arg6[%c37, %c0_16] : memref<336x4xbf16, #tpu.memory_space<vmem>>, vector<288x4xbf16>
    %21 = arith.extf %20 : vector<288x4xbf16> to vector<288x4xf32>
    %c38 = arith.constant 38 : index
    %c0_17 = arith.constant 0 : index
    %22 = vector.load %arg6[%c38, %c0_17] : memref<336x4xbf16, #tpu.memory_space<vmem>>, vector<288x4xbf16>
    %23 = arith.extf %22 : vector<288x4xbf16> to vector<288x4xf32>
    %24 = tpu.concatenate %7, %9, %11, %13, %15, %17, %19, %21, %23 in 1 : vector<288x4xf32>, vector<288x4xf32>, vector<288x4xf32>, vector<288x4xf32>, vector<288x4xf32>, vector<288x4xf32>, vector<288x4xf32>, vector<288x4xf32>, vector<288x4xf32> -> vector<288x36xf32>
    %25 = arith.truncf %24 : vector<288x36xf32> to vector<288x36xbf16>
    %c0_18 = arith.constant 0 : index
    %c0_19 = arith.constant 0 : index
    %26 = vector.load %arg4[%c0_18, %c0_19] : memref<36x128xbf16, #tpu.memory_space<vmem>>, vector<36x128xbf16>
    %cst = arith.constant dense<0.000000e+00> : vector<288x128xf32>
    %27 = tpu.matmul %25, %26, %cst {dimension_numbers = #tpu.dot_dimension_numbers<[1], [0], [0], [1], [0, 0, 1, 1], [], []>} : vector<288x36xbf16>, vector<36x128xbf16>, vector<288x128xf32> -> vector<288x128xf32>
    %cst_20 = arith.constant 0.000000e+00 : f32
    %28 = vector.broadcast %cst_20 : f32 to vector<288x128xf32>
    %29 = arith.cmpf ogt, %27, %28 : vector<288x128xf32>
    %cst_21 = arith.constant 2.000000e-01 : f32
    %30 = vector.broadcast %cst_21 : f32 to vector<288x128xf32>
    %31 = arith.mulf %30, %27 : vector<288x128xf32>
    %32 = arith.select %29, %27, %31 : vector<288x128xi1>, vector<288x128xf32>
    %33 = arith.truncf %32 : vector<288x128xf32> to vector<288x128xbf16>
    %c0_22 = arith.constant 0 : index
    %c0_23 = arith.constant 0 : index
    %c0_24 = arith.constant 0 : index
    %34 = vector.load %arg5[%c0_22, %c0_23, %c0_24] : memref<1x288x128xbf16, #tpu.memory_space<vmem>>, vector<1x288x128xbf16>
    %35 = vector.shape_cast %34 : vector<1x288x128xbf16> to vector<288x128xbf16>
    %36 = vector.shape_cast %33 : vector<288x128xbf16> to vector<1x288x128xbf16>
    tpu.vector_store %arg5[%c0_22, %c0_23, %c0_24], %36 {strides = array<i32>} : memref<1x288x128xbf16, #tpu.memory_space<vmem>>, vector<1x288x128xbf16>,
    return
  }
  func.func @transform_0(%arg0: i32, %arg1: i32) -> (i32, i32, i32) {
    %c0_i32 = arith.constant 0 : i32
    %c0_i32_0 = arith.constant 0 : i32
    return %arg0, %arg1, %c0_i32 : i32, i32, i32
  }
  func.func @transform_1(%arg0: i32, %arg1: i32) -> (i32, i32, i32) {
    %c1_i32 = arith.constant 1 : i32
    %0 = arith.addi %arg1, %c1_i32 : i32
    %c6_i32 = arith.constant 6 : i32
    %1 = arith.muli %0, %c6_i32 : i32
    %c0_i32 = arith.constant 0 : i32
    %c0_i32_0 = arith.constant 0 : i32
    return %arg0, %1, %c0_i32 : i32, i32, i32
  }
  func.func @transform_2(%arg0: i32, %arg1: i32) -> (i32, i32) {
    %c0_i32 = arith.constant 0 : i32
    %c0_i32_0 = arith.constant 0 : i32
    %c0_i32_1 = arith.constant 0 : i32
    return %c0_i32, %c0_i32_0 : i32, i32
  }
  func.func @transform_3(%arg0: i32, %arg1: i32) -> (i32, i32, i32) {
    %c0_i32 = arith.constant 0 : i32
    %c0_i32_0 = arith.constant 0 : i32
    return %arg0, %arg1, %c0_i32 : i32, i32, i32
  }
}

</mosaic_0001>

<llo_original>
// kernel: basic_conv.1
$region0: #{basic_conv.1}
  #allocation0 [shape = 'u32[]', space=smem, size = 0x4, offset = 0x4, fixed_abs, tag = 'smem constant byte address 0x4 - core index']
  #allocation1 [shape = 'u32[144,128]{1,0:T(1,128)}', space=vmem, size = 0x12000, scoped, tag = 'internal scratch']
  #allocation2 [shape = 'bf16[336,4]{1,0:T(8,128)(2,1)}', space=vmem, size = 0x15000, scoped, tag = 'scratch operand']
  %s0 = inlined_call_operand.vmem [shape: bf16[2,336,4], index: 0, kind: input, shape index: {}, may-alias: {0,1}]
  %s1 = inlined_call_operand.vmem [shape: bf16[2,336,4], index: 1, kind: input, shape index: {}, may-alias: {0,1}]
  %s2 = inlined_call_operand.vmem [shape: bf16[36,128], index: 2, kind: input, shape index: {}]
  %s3 = inlined_call_operand.vmem [shape: bf16[2,288,128], index: 3, kind: output, shape index: {}]
  %s4 = sld [smem:[#allocation0]]
  $region45: #{basic_conv.1} parent=0
    _
  %s6 = ssub.s32 1, %s4
  %s7 = scalar_select 0, %s6, %s4
  loop: start=0, step=1, limit=4
  $region2: #{basic_conv.1} parent=0 // loop_pre_header
    _
  $region3: #{basic_conv.1} parent=0 // loop_header
    %s9 = sphi 0, %s13
    %p10 = scmp.ge.s32.totalorder %s9, 4
    %s16 = sphi 0, %s28
    %s17 = sphi 0, %s24
    %s18 = sphi 0, %s16
    %s19 = sphi 0, %s17
    %s20 = sphi 0, %s18
    %s21 = sphi 0, %s19
    %s33 = sphi 0, %s35
    %s36 = sphi 0, %s33
    %s37 = sphi 0, %s36
    %s53 = sphi 0, %s37
    %s65 = sphi 0, %s67
    %s68 = sphi 0, %s65
    %s69 = sphi 0, %s68
    %s85 = sphi 0, %s69
    %s89 = sphi 0, %s89
    %s91 = sphi 0, %s89
    %s92 = sphi 0, %s91
    %s106 = sphi 0, %s92
    %s114 = sphi 0, %s116
    %s117 = sphi 0, %s114
    %s118 = sphi 0, %s117
    %s134 = sphi 0, %s118
  $region4: #{basic_conv.1} parent=0 // loop_header_branch
    %12 = sbr.rel (%p10) target = $region8
  $region5: #{basic_conv.1} parent=0 // loop_body
    %s14 = ssub.s32 %s9, 1
    %s15 = ssub.s32 %s9, 2
    %s22 = sadd.s32 1, %s17
    %p23 = scmp.ge.s32.totalorder %s22, 1
    %s24 = scalar_select %p23, 0, %s22
    %s25 = sadd.s32 1, %s16
    %s26 = scalar_select %p23, %s25, %s16
    %p27 = scmp.ge.s32.totalorder %s26, 2
    %s28 = scalar_select %p27, 0, %s26
    %s29 = ssub.s32 %s16, %s28
    %s30 = ssub.s32 %s17, %s24
    %s31 = sor.u32 %s29, %s30
    %p32 = scmp.eq.s32.totalorder %s31, 0
    %s34 = sadd.s32 %s33, 1
    %s35 = scalar_select %p32, %s33, %s34
    %p38 = pneg %p32
    %p39 = scmp.eq.s32.totalorder %s9, 1
    %p40 = por %p38, %p39
    %p41 = scmp.ne.s32.totalorder %s33, %s36
    %p42 = scmp.eq.s32.totalorder %s9, 0
    %p43 = por %p41, %p42
    %p44 = scmp.ne.s32.totalorder %s33, %s36
    %p45 = scmp.eq.s32.totalorder %s14, 1
    %p46 = por %p44, %p45
    %p47 = scmp.ne.s32.totalorder %s36, %s37
    %p48 = scmp.eq.s32.totalorder %s14, 0
    %p49 = por %p47, %p48
    %p50 = scmp.ne.s32.totalorder %s36, %s37
    %p51 = scmp.eq.s32.totalorder %s15, 1
    %p52 = por %p50, %p51
    %p54 = scmp.ne.s32.totalorder %s37, %s53
    %p55 = scmp.eq.s32.totalorder %s15, 0
    %p56 = por %p54, %p55
    %s57 = sadd.s32 %s17, 1
    %s58 = smul.u32 %s57, 6
    %s59 = sadd.s32 %s24, 1
    %s60 = smul.u32 %s59, 6
    %s61 = ssub.s32 %s16, %s28
    %s62 = ssub.s32 %s58, %s60
    %s63 = sor.u32 %s61, %s62
    %p64 = scmp.eq.s32.totalorder %s63, 0
    %s66 = sadd.s32 %s65, 1
    %s67 = scalar_select %p64, %s65, %s66
    %p70 = pneg %p64
    %p71 = scmp.eq.s32.totalorder %s9, 1
    %p72 = por %p70, %p71
    %p73 = scmp.ne.s32.totalorder %s65, %s68
    %p74 = scmp.eq.s32.totalorder %s9, 0
    %p75 = por %p73, %p74
    %p76 = scmp.ne.s32.totalorder %s65, %s68
    %p77 = scmp.eq.s32.totalorder %s14, 1
    %p78 = por %p76, %p77
    %p79 = scmp.ne.s32.totalorder %s68, %s69
    %p80 = scmp.eq.s32.totalorder %s14, 0
    %p81 = por %p79, %p80
    %p82 = scmp.ne.s32.totalorder %s68, %s69
    %p83 = scmp.eq.s32.totalorder %s15, 1
    %p84 = por %p82, %p83
    %p86 = scmp.ne.s32.totalorder %s69, %s85
    %p87 = scmp.eq.s32.totalorder %s15, 0
    %p88 = por %p86, %p87
    %s90 = sadd.s32 %s89, 1
    %p93 = scmp.eq.s32.totalorder %s9, 1
    %p94 = scmp.ne.s32.totalorder %s89, %s91
    %p95 = scmp.eq.s32.totalorder %s9, 0
    %p96 = por %p94, %p95
    %p97 = scmp.ne.s32.totalorder %s89, %s91
    %p98 = scmp.eq.s32.totalorder %s14, 1
    %p99 = por %p97, %p98
    %p100 = scmp.ne.s32.totalorder %s91, %s92
    %p101 = scmp.eq.s32.totalorder %s14, 0
    %p102 = por %p100, %p101
    %p103 = scmp.ne.s32.totalorder %s91, %s92
    %p104 = scmp.eq.s32.totalorder %s15, 1
    %p105 = por %p103, %p104
    %p107 = scmp.ne.s32.totalorder %s92, %s106
    %p108 = scmp.eq.s32.totalorder %s15, 0
    %p109 = por %p107, %p108
    %s110 = ssub.s32 %s16, %s28
    %s111 = ssub.s32 %s17, %s24
    %s112 = sor.u32 %s110, %s111
    %p113 = scmp.eq.s32.totalorder %s112, 0
    %s115 = sadd.s32 %s114, 1
    %s116 = scalar_select %p113, %s114, %s115
    %p119 = pneg %p113
    %p120 = scmp.eq.s32.totalorder %s9, 1
    %p121 = por %p119, %p120
    %p122 = scmp.ne.s32.totalorder %s114, %s117
    %p123 = scmp.eq.s32.totalorder %s9, 0
    %p124 = por %p122, %p123
    %p125 = scmp.ne.s32.totalorder %s114, %s117
    %p126 = scmp.eq.s32.totalorder %s14, 1
    %p127 = por %p125, %p126
    %p128 = scmp.ne.s32.totalorder %s117, %s118
    %p129 = scmp.eq.s32.totalorder %s14, 0
    %p130 = por %p128, %p129
    %p131 = scmp.ne.s32.totalorder %s117, %s118
    %p132 = scmp.eq.s32.totalorder %s15, 1
    %p133 = por %p131, %p132
    %p135 = scmp.ne.s32.totalorder %s118, %s134
    %p136 = scmp.eq.s32.totalorder %s15, 0
    %p137 = por %p135, %p136
    %p138 = scmp.le.s32.totalorder 1, %s9
    %p139 = scmp.lt.s32.totalorder %s9, 3
    %p140 = pnand %p138, %p139
    %p141 = pneg %p140
    // Predicated region
    $region9: #{basic_conv.1} parent=5 // pred_check
      _
    $region10: #{basic_conv.1} parent=5 // pred_check_branch
      %143 = sbr.rel (%p140) target = $region12
    $region11: #{basic_conv.1} parent=5 // pred_region
      %s144 = ssub.s32 %s9, 1
      // Predicated region
      $region13: #{basic_conv.1} parent=11 // pred_check
        %p145 = pneg %p102
      $region14: #{basic_conv.1} parent=11 // pred_check_branch
        %147 = sbr.rel (%p145) target = $region16
      $region15: #{basic_conv.1} parent=11 // pred_region
        _
      $region16: #{basic_conv.1} parent=11 // pred_fallthru
        _
    $region12: #{basic_conv.1} parent=5 // pred_fallthru
      _
    %p148 = scmp.lt.s32.totalorder %s9, 2
    // Predicated region
    $region17: #{basic_conv.1} parent=5 // pred_check
      %p149 = pneg %p148
    $region18: #{basic_conv.1} parent=5 // pred_check_branch
      %151 = sbr.rel (%p149) target = $region20
    $region19: #{basic_conv.1} parent=5 // pred_region
      // Predicated region
      $region21: #{basic_conv.1} parent=19 // pred_check
        %p152 = pneg %p43
      $region22: #{basic_conv.1} parent=19 // pred_check_branch
        %154 = sbr.rel (%p152) target = $region24
      $region23: #{basic_conv.1} parent=19 // pred_region
        %s155 = smul.u32 36, %s17
        %s156 = ssub.s32 42, %s155
        %p157 = scmp.lt.s32.totalorder %s156, 36
        %s158 = scalar_select %p157, %s156, 36
        %s159 = smul.u32 64, %s158
        %p160 = scmp.lt.s32.totalorder %s16, 1
        %s161 = scalar_select %p160, %s16, 1
        %p162 = scmp.lt.s32.totalorder %s155, 41
        %s163 = scalar_select %p162, %s155, 41
        %s164 = smul.addr %s161, 42
        %s165 = sadd.s32 %s163, %s164
        %s166 = smul.addr %s165, 4
        %s167 = scalar_lea.vmem %s0, %s166
        %s168 = smul.u32 36, %s17
        %s169 = ssub.s32 42, %s168
        %p170 = scmp.lt.s32.totalorder %s169, 36
        %s171 = scalar_select %p170, %s169, 36
        %s172 = smul.u32 64, %s171
      $region24: #{basic_conv.1} parent=19 // pred_fallthru
        _
      // Predicated region
      $region25: #{basic_conv.1} parent=19 // pred_check
        %p173 = pneg %p75
      $region26: #{basic_conv.1} parent=19 // pred_check_branch
        %175 = sbr.rel (%p173) target = $region28
      $region27: #{basic_conv.1} parent=19 // pred_region
        %s176 = sadd.s32 %s17, 1
        %s177 = smul.u32 %s176, 6
        %s178 = smul.u32 6, %s177
        %p179 = scmp.lt.s32.totalorder %s16, 1
        %s180 = scalar_select %p179, %s16, 1
        %p181 = scmp.lt.s32.totalorder %s178, 41
        %s182 = scalar_select %p181, %s178, 41
        %s183 = smul.addr %s180, 42
        %s184 = sadd.s32 %s182, %s183
        %s185 = smul.addr %s184, 4
        %s186 = scalar_lea.vmem %s1, %s185
        %s187 = sadd.s32 %s17, 1
        %s188 = smul.u32 %s187, 6
        %s189 = smul.u32 6, %s188
      $region28: #{basic_conv.1} parent=19 // pred_fallthru
        _
    $region20: #{basic_conv.1} parent=5 // pred_fallthru
      _
    %p190 = scmp.le.s32.totalorder 1, %s9
    %p191 = scmp.lt.s32.totalorder %s9, 3
    %p192 = pnand %p190, %p191
    %p193 = pneg %p192
    // Predicated region
    $region29: #{basic_conv.1} parent=5 // pred_check
      _
    $region30: #{basic_conv.1} parent=5 // pred_check_branch
      %195 = sbr.rel (%p192) target = $region32
    $region31: #{basic_conv.1} parent=5 // pred_region
      %s196 = ssub.s32 %s9, 1
      %s197 = smul.u32 36, %s19
      %s198 = ssub.s32 42, %s197
      %p199 = scmp.lt.s32.totalorder %s198, 36
      %s200 = scalar_select %p199, %s198, 36
      %s201 = smul.u32 64, %s200
      %p202 = scmp.lt.s32.totalorder %s18, 1
      %s203 = scalar_select %p202, %s18, 1
      %p204 = scmp.lt.s32.totalorder %s197, 41
      %s205 = scalar_select %p204, %s197, 41
      %s206 = smul.addr %s203, 42
      %s207 = sadd.s32 %s205, %s206
      %s208 = smul.addr %s207, 4
      %s209 = scalar_lea.vmem %s0, %s208
      %p210 = pneg %p49
      %p211 = pneg %p46
      %s212 = sadd.s32 %s19, 1
      %s213 = smul.u32 %s212, 6
      %s214 = smul.u32 6, %s213
      %p215 = scmp.lt.s32.totalorder %s18, 1
      %s216 = scalar_select %p215, %s18, 1
      %p217 = scmp.lt.s32.totalorder %s214, 41
      %s218 = scalar_select %p217, %s214, 41
      %s219 = smul.addr %s216, 42
      %s220 = sadd.s32 %s218, %s219
      %s221 = smul.addr %s220, 4
      %s222 = scalar_lea.vmem %s1, %s221
      %p223 = pneg %p81
      %p224 = pneg %p78
      %p225 = pneg %p102
      %p226 = pneg %p99
      %p227 = pneg %p130
      %p228 = pneg %p127
      %s229 = smul.u32 36, %s19
      %p230 = scmp.lt.s32.totalorder %s18, 1
      %s231 = scalar_select %p230, %s18, 1
      %p232 = scmp.lt.s32.totalorder %s229, 35
      %s233 = scalar_select %p232, %s229, 35
      %s234 = smul.addr %s231, 36
      %s235 = sadd.s32 %s233, %s234
      %s236 = smul.addr %s235, 4
      %s237 = scalar_lea.vmem %s3, %s236
      %s238 = smul.u32 36, %s19
      %s239 = ssub.s32 42, %s238
      %p240 = scmp.lt.s32.totalorder %s239, 36
      %s241 = scalar_select %p240, %s239, 36
      %s242 = smul.u32 64, %s241
      %p243 = scmp.lt.s32.totalorder %s18, 1
      %s244 = scalar_select %p243, %s18, 1
      %p245 = scmp.lt.s32.totalorder %s238, 41
      %s246 = scalar_select %p245, %s238, 41
      %s247 = smul.addr %s244, 42
      %s248 = sadd.s32 %s246, %s247
      %s249 = smul.addr %s248, 4
      %s250 = scalar_lea.vmem %s0, %s249
      %s251 = smul.u32 36, %s19
      %s252 = ssub.s32 42, %s251
      %p253 = scmp.lt.s32.totalorder %s252, 36
      %s254 = scalar_select %p253, %s252, 36
      %s255 = smul.u32 64, %s254
      %s256 = sadd.s32 %s19, 1
      %s257 = smul.u32 %s256, 6
      %s258 = smul.u32 6, %s257
      %p259 = scmp.lt.s32.totalorder %s18, 1
      %s260 = scalar_select %p259, %s18, 1
      %p261 = scmp.lt.s32.totalorder %s258, 41
      %s262 = scalar_select %p261, %s258, 41
      %s263 = smul.addr %s260, 42
      %s264 = sadd.s32 %s262, %s263
      %s265 = smul.addr %s264, 4
      %s266 = scalar_lea.vmem %s1, %s265
      %s267 = sadd.s32 %s19, 1
      %s268 = smul.u32 %s267, 6
      %s269 = smul.u32 6, %s268
      %s270 = smul.u32 36, %s19
      %p271 = scmp.lt.s32.totalorder %s18, 1
      %s272 = scalar_select %p271, %s18, 1
      %p273 = scmp.lt.s32.totalorder %s270, 35
      %s274 = scalar_select %p273, %s270, 35
      %s275 = smul.addr %s272, 36
      %s276 = sadd.s32 %s274, %s275
      %s277 = smul.addr %s276, 4
      %s278 = scalar_lea.vmem %s3, %s277
      %s279 = smul.u32 36, %s19
      %v281 = vld [vmem:[%s250] sm:$0xf]
      %v282 = vld [vmem:[%s250 + $0x4] sm:$0xf]
      %v283 = vld [vmem:[%s250 + $0x8] sm:$0xf]
      %v284 = vld [vmem:[%s250 + $0xc] sm:$0xf]
      %v285 = vld [vmem:[%s250 + $0x10] sm:$0xf]
      %v286 = vld [vmem:[%s250 + $0x14] sm:$0xf]
      %v287 = vld [vmem:[%s250 + $0x18] sm:$0xf]
      %v288 = vld [vmem:[%s250 + $0x1c] sm:$0xf]
      %v289 = vld [vmem:[%s250 + $0x20] sm:$0xf]
      %v290 = vld [vmem:[%s250 + $0x24] sm:$0xf]
      %v291 = vld [vmem:[%s250 + $0x28] sm:$0xf]
      %v292 = vld [vmem:[%s250 + $0x2c] sm:$0xf]
      %v293 = vld [vmem:[%s250 + $0x30] sm:$0xf]
      %v294 = vld [vmem:[%s250 + $0x34] sm:$0xf]
      %v295 = vld [vmem:[%s250 + $0x38] sm:$0xf]
      %v296 = vld [vmem:[%s250 + $0x3c] sm:$0xf]
      %v297 = vld [vmem:[%s250 + $0x40] sm:$0xf]
      %v298 = vld [vmem:[%s250 + $0x44] sm:$0xf]
      %v299 = vld [vmem:[%s250 + $0x48] sm:$0xf]
      %v300 = vld [vmem:[%s250 + $0x4c] sm:$0xf]
      %v301 = vld [vmem:[%s250 + $0x50] sm:$0xf]
      %v302 = vld [vmem:[%s250 + $0x54] sm:$0xf]
      %v303 = vld [vmem:[%s250 + $0x58] sm:$0xf]
      %v304 = vld [vmem:[%s250 + $0x5c] sm:$0xf]
      %v305 = vld [vmem:[%s250 + $0x60] sm:$0xf]
      %v306 = vld [vmem:[%s250 + $0x64] sm:$0xf]
      %v307 = vld [vmem:[%s250 + $0x68] sm:$0xf]
      %v308 = vld [vmem:[%s250 + $0x6c] sm:$0xf]
      %v309 = vld [vmem:[%s250 + $0x70] sm:$0xf]
      %v310 = vld [vmem:[%s250 + $0x74] sm:$0xf]
      %v311 = vld [vmem:[%s250 + $0x78] sm:$0xf]
      %v312 = vld [vmem:[%s250 + $0x7c] sm:$0xf]
      %v313 = vld [vmem:[%s250 + $0x80] sm:$0xf]
      %v314 = vld [vmem:[%s250 + $0x84] sm:$0xf]
      %v315 = vld [vmem:[%s250 + $0x88] sm:$0xf]
      %v316 = vld [vmem:[%s250 + $0x8c] sm:$0xf]
      %vm317 = vcmask 27648
      %318 = vst.msk [vmem:[#allocation2] sm:$0xf] %vm317, %v281
      %319 = vst.msk [vmem:[#allocation2 + $0x4] sm:$0xf] %vm317, %v282
      %320 = vst.msk [vmem:[#allocation2 + $0x8] sm:$0xf] %vm317, %v283
      %321 = vst.msk [vmem:[#allocation2 + $0xc] sm:$0xf] %vm317, %v284
      %322 = vst.msk [vmem:[#allocation2 + $0x10] sm:$0xf] %vm317, %v285
      %323 = vst.msk [vmem:[#allocation2 + $0x14] sm:$0xf] %vm317, %v286
      %324 = vst.msk [vmem:[#allocation2 + $0x18] sm:$0xf] %vm317, %v287
      %325 = vst.msk [vmem:[#allocation2 + $0x1c] sm:$0xf] %vm317, %v288
      %326 = vst.msk [vmem:[#allocation2 + $0x20] sm:$0xf] %vm317, %v289
      %327 = vst.msk [vmem:[#allocation2 + $0x24] sm:$0xf] %vm317, %v290
      %328 = vst.msk [vmem:[#allocation2 + $0x28] sm:$0xf] %vm317, %v291
      %329 = vst.msk [vmem:[#allocation2 + $0x2c] sm:$0xf] %vm317, %v292
      %330 = vst.msk [vmem:[#allocation2 + $0x30] sm:$0xf] %vm317, %v293
      %331 = vst.msk [vmem:[#allocation2 + $0x34] sm:$0xf] %vm317, %v294
      %332 = vst.msk [vmem:[#allocation2 + $0x38] sm:$0xf] %vm317, %v295
      %333 = vst.msk [vmem:[#allocation2 + $0x3c] sm:$0xf] %vm317, %v296
      %334 = vst.msk [vmem:[#allocation2 + $0x40] sm:$0xf] %vm317, %v297
      %335 = vst.msk [vmem:[#allocation2 + $0x44] sm:$0xf] %vm317, %v298
      %336 = vst.msk [vmem:[#allocation2 + $0x48] sm:$0xf] %vm317, %v299
      %337 = vst.msk [vmem:[#allocation2 + $0x4c] sm:$0xf] %vm317, %v300
      %338 = vst.msk [vmem:[#allocation2 + $0x50] sm:$0xf] %vm317, %v301
      %339 = vst.msk [vmem:[#allocation2 + $0x54] sm:$0xf] %vm317, %v302
      %340 = vst.msk [vmem:[#allocation2 + $0x58] sm:$0xf] %vm317, %v303
      %341 = vst.msk [vmem:[#allocation2 + $0x5c] sm:$0xf] %vm317, %v304
      %342 = vst.msk [vmem:[#allocation2 + $0x60] sm:$0xf] %vm317, %v305
      %343 = vst.msk [vmem:[#allocation2 + $0x64] sm:$0xf] %vm317, %v306
      %344 = vst.msk [vmem:[#allocation2 + $0x68] sm:$0xf] %vm317, %v307
      %345 = vst.msk [vmem:[#allocation2 + $0x6c] sm:$0xf] %vm317, %v308
      %346 = vst.msk [vmem:[#allocation2 + $0x70] sm:$0xf] %vm317, %v309
      %347 = vst.msk [vmem:[#allocation2 + $0x74] sm:$0xf] %vm317, %v310
      %348 = vst.msk [vmem:[#allocation2 + $0x78] sm:$0xf] %vm317, %v311
      %349 = vst.msk [vmem:[#allocation2 + $0x7c] sm:$0xf] %vm317, %v312
      %350 = vst.msk [vmem:[#allocation2 + $0x80] sm:$0xf] %vm317, %v313
      %351 = vst.msk [vmem:[#allocation2 + $0x84] sm:$0xf] %vm317, %v314
      %352 = vst.msk [vmem:[#allocation2 + $0x88] sm:$0xf] %vm317, %v315
      %353 = vst.msk [vmem:[#allocation2 + $0x8c] sm:$0xf] %vm317, %v316
      %v354 = vld [vmem:[%s266] sm:$0xf]
      %v355 = vld [vmem:[%s266 + $0x4] sm:$0xf]
      %v356 = vld [vmem:[%s266 + $0x8] sm:$0xf]
      %v357 = vld [vmem:[%s266 + $0xc] sm:$0xf]
      %v358 = vld [vmem:[%s266 + $0x10] sm:$0xf]
      %v359 = vld [vmem:[%s266 + $0x14] sm:$0xf]
      %360 = vst.msk [vmem:[#allocation2 + $0x90] sm:$0xf] %vm317, %v354
      %361 = vst.msk [vmem:[#allocation2 + $0x94] sm:$0xf] %vm317, %v355
      %362 = vst.msk [vmem:[#allocation2 + $0x98] sm:$0xf] %vm317, %v356
      %363 = vst.msk [vmem:[#allocation2 + $0x9c] sm:$0xf] %vm317, %v357
      %364 = vst.msk [vmem:[#allocation2 + $0xa0] sm:$0xf] %vm317, %v358
      %365 = vst.msk [vmem:[#allocation2 + $0xa4] sm:$0xf] %vm317, %v359
      %v366 = vld [vmem:[#allocation2] sm:$0xf]
      %v367 = vld [vmem:[#allocation2 + $0x4] sm:$0xf]
      %v368 = vld [vmem:[#allocation2 + $0x8] sm:$0xf]
      %v369 = vld [vmem:[#allocation2 + $0xc] sm:$0xf]
      %v370 = vld [vmem:[#allocation2 + $0x10] sm:$0xf]
      %v371 = vld [vmem:[#allocation2 + $0x14] sm:$0xf]
      %v372 = vld [vmem:[#allocation2 + $0x18] sm:$0xf]
      %v373 = vld [vmem:[#allocation2 + $0x1c] sm:$0xf]
      %v374 = vld [vmem:[#allocation2 + $0x20] sm:$0xf]
      %v375 = vld [vmem:[#allocation2 + $0x24] sm:$0xf]
      %v376 = vld [vmem:[#allocation2 + $0x28] sm:$0xf]
      %v377 = vld [vmem:[#allocation2 + $0x2c] sm:$0xf]
      %v378 = vld [vmem:[#allocation2 + $0x30] sm:$0xf]
      %v379 = vld [vmem:[#allocation2 + $0x34] sm:$0xf]
      %v380 = vld [vmem:[#allocation2 + $0x38] sm:$0xf]
      %v381 = vld [vmem:[#allocation2 + $0x3c] sm:$0xf]
      %v382 = vld [vmem:[#allocation2 + $0x40] sm:$0xf]
      %v383 = vld [vmem:[#allocation2 + $0x44] sm:$0xf]
      %v384 = vld [vmem:[#allocation2 + $0x48] sm:$0xf]
      %v385 = vld [vmem:[#allocation2 + $0x4c] sm:$0xf]
      %v386 = vld [vmem:[#allocation2 + $0x50] sm:$0xf]
      %v387 = vld [vmem:[#allocation2 + $0x54] sm:$0xf]
      %v388 = vld [vmem:[#allocation2 + $0x58] sm:$0xf]
      %v389 = vld [vmem:[#allocation2 + $0x5c] sm:$0xf]
      %v390 = vld [vmem:[#allocation2 + $0x60] sm:$0xf]
      %v391 = vld [vmem:[#allocation2 + $0x64] sm:$0xf]
      %v392 = vld [vmem:[#allocation2 + $0x68] sm:$0xf]
      %v393 = vld [vmem:[#allocation2 + $0x6c] sm:$0xf]
      %v394 = vld [vmem:[#allocation2 + $0x70] sm:$0xf]
      %v395 = vld [vmem:[#allocation2 + $0x74] sm:$0xf]
      %v396 = vld [vmem:[#allocation2 + $0x78] sm:$0xf]
      %v397 = vld [vmem:[#allocation2 + $0x7c] sm:$0xf]
      %v398 = vld [vmem:[#allocation2 + $0x80] sm:$0xf]
      %v399 = vld [vmem:[#allocation2 + $0x84] sm:$0xf]
      %v400 = vld [vmem:[#allocation2 + $0x88] sm:$0xf]
      %v401 = vld [vmem:[#allocation2 + $0x8c] sm:$0xf]
      %v402 = vunpack.c.l.bf16 %v366
      %v403 = vunpack.c.l.bf16 %v367
      %v404 = vunpack.c.l.bf16 %v368
      %v405 = vunpack.c.l.bf16 %v369
      %v406 = vunpack.c.l.bf16 %v370
      %v407 = vunpack.c.l.bf16 %v371
      %v408 = vunpack.c.l.bf16 %v372
      %v409 = vunpack.c.l.bf16 %v373
      %v410 = vunpack.c.l.bf16 %v374
      %v411 = vunpack.c.l.bf16 %v375
      %v412 = vunpack.c.l.bf16 %v376
      %v413 = vunpack.c.l.bf16 %v377
      %v414 = vunpack.c.l.bf16 %v378
      %v415 = vunpack.c.l.bf16 %v379
      %v416 = vunpack.c.l.bf16 %v380
      %v417 = vunpack.c.l.bf16 %v381
      %v418 = vunpack.c.l.bf16 %v382
      %v419 = vunpack.c.l.bf16 %v383
      %v420 = vunpack.c.l.bf16 %v384
      %v421 = vunpack.c.l.bf16 %v385
      %v422 = vunpack.c.l.bf16 %v386
      %v423 = vunpack.c.l.bf16 %v387
      %v424 = vunpack.c.l.bf16 %v388
      %v425 = vunpack.c.l.bf16 %v389
      %v426 = vunpack.c.l.bf16 %v390
      %v427 = vunpack.c.l.bf16 %v391
      %v428 = vunpack.c.l.bf16 %v392
      %v429 = vunpack.c.l.bf16 %v393
      %v430 = vunpack.c.l.bf16 %v394
      %v431 = vunpack.c.l.bf16 %v395
      %v432 = vunpack.c.l.bf16 %v396
      %v433 = vunpack.c.l.bf16 %v397
      %v434 = vunpack.c.l.bf16 %v398
      %v435 = vunpack.c.l.bf16 %v399
      %v436 = vunpack.c.l.bf16 %v400
      %v437 = vunpack.c.l.bf16 %v401
      %v438 = vld [vmem:[#allocation2 + $0x90] sm:$0x1]
      %v439 = vunpack.c.l.bf16 %v438
      %v440 = vld [vmem:[#allocation2] sm:$0xe]
      %v441 = vunpack.c.l.bf16 %v440
      %v442 = vld [vmem:[#allocation2 + $0x8] sm:$0xe]
      %v443 = vld [vmem:[#allocation2 + $0x90] sm:$0xf]
      %v444 = vld [vmem:[#allocation2 + $0x94] sm:$0xf]
      %v445 = vld [vmem:[#allocation2 + $0x98] sm:$0x1]
      %v446 = vunpack.c.l.bf16 %v442
      %v447 = vunpack.c.l.bf16 %v443
      %v448 = vunpack.c.l.bf16 %v444
      %v449 = vunpack.c.l.bf16 %v445
      %v450 = vld [vmem:[#allocation2 + $0x98] sm:$0x3]
      %v451 = vunpack.c.l.bf16 %v450
      %v452 = vld [vmem:[#allocation2 + $0x8] sm:$0xc]
      %v453 = vunpack.c.l.bf16 %v452
      %v454 = vld [vmem:[#allocation2 + $0x10] sm:$0xc]
      %v455 = vld [vmem:[#allocation2 + $0x98] sm:$0xf]
      %v456 = vld [vmem:[#allocation2 + $0x9c] sm:$0xf]
      %v457 = vld [vmem:[#allocation2 + $0xa0] sm:$0x3]
      %v458 = vunpack.c.l.bf16 %v454
      %v459 = vunpack.c.l.bf16 %v455
      %v460 = vunpack.c.l.bf16 %v456
      %v461 = vunpack.c.l.bf16 %v457
      %v462 = vld [vmem:[#allocation2 + $0xa0] sm:$0x7]
      %v463 = vunpack.c.l.bf16 %v462
      %v464 = vld [vmem:[#allocation2 + $0x10] sm:$0x8]
      %v465 = vunpack.c.l.bf16 %v464
      %vm503 = vcmask 1046528
      %v504 = vrot.slane %v402, 1
      %v505 = vrot.slane %v403, 1
      %v506 = vsel %vm503, %v504, %v505
      %v507 = vrot.slane %v404, 1
      %v508 = vsel %vm503, %v505, %v507
      %v509 = vrot.slane %v405, 1
      %v510 = vsel %vm503, %v507, %v509
      %v511 = vrot.slane %v406, 1
      %v512 = vsel %vm503, %v509, %v511
      %v513 = vrot.slane %v407, 1
      %v514 = vsel %vm503, %v511, %v513
      %v515 = vrot.slane %v408, 1
      %v516 = vsel %vm503, %v513, %v515
      %v517 = vrot.slane %v409, 1
      %v518 = vsel %vm503, %v515, %v517
      %v519 = vrot.slane %v410, 1
      %v520 = vsel %vm503, %v517, %v519
      %v521 = vrot.slane %v411, 1
      %v522 = vsel %vm503, %v519, %v521
      %v523 = vrot.slane %v412, 1
      %v524 = vsel %vm503, %v521, %v523
      %v525 = vrot.slane %v413, 1
      %v526 = vsel %vm503, %v523, %v525
      %v527 = vrot.slane %v414, 1
      %v528 = vsel %vm503, %v525, %v527
      %v529 = vrot.slane %v415, 1
      %v530 = vsel %vm503, %v527, %v529
      %v531 = vrot.slane %v416, 1
      %v532 = vsel %vm503, %v529, %v531
      %v533 = vrot.slane %v417, 1
      %v534 = vsel %vm503, %v531, %v533
      %v535 = vrot.slane %v418, 1
      %v536 = vsel %vm503, %v533, %v535
      %v537 = vrot.slane %v419, 1
      %v538 = vsel %vm503, %v535, %v537
      %v539 = vrot.slane %v420, 1
      %v540 = vsel %vm503, %v537, %v539
      %v541 = vrot.slane %v421, 1
      %v542 = vsel %vm503, %v539, %v541
      %v543 = vrot.slane %v422, 1
      %v544 = vsel %vm503, %v541, %v543
      %v545 = vrot.slane %v423, 1
      %v546 = vsel %vm503, %v543, %v545
      %v547 = vrot.slane %v424, 1
      %v548 = vsel %vm503, %v545, %v547
      %v549 = vrot.slane %v425, 1
      %v550 = vsel %vm503, %v547, %v549
      %v551 = vrot.slane %v426, 1
      %v552 = vsel %vm503, %v549, %v551
      %v553 = vrot.slane %v427, 1
      %v554 = vsel %vm503, %v551, %v553
      %v555 = vrot.slane %v428, 1
      %v556 = vsel %vm503, %v553, %v555
      %v557 = vrot.slane %v429, 1
      %v558 = vsel %vm503, %v555, %v557
      %v559 = vrot.slane %v430, 1
      %v560 = vsel %vm503, %v557, %v559
      %v561 = vrot.slane %v431, 1
      %v562 = vsel %vm503, %v559, %v561
      %v563 = vrot.slane %v432, 1
      %v564 = vsel %vm503, %v561, %v563
      %v565 = vrot.slane %v433, 1
      %v566 = vsel %vm503, %v563, %v565
      %v567 = vrot.slane %v434, 1
      %v568 = vsel %vm503, %v565, %v567
      %v569 = vrot.slane %v435, 1
      %v570 = vsel %vm503, %v567, %v569
      %v571 = vrot.slane %v436, 1
      %v572 = vsel %vm503, %v569, %v571
      %v573 = vrot.slane %v437, 1
      %v574 = vsel %vm503, %v571, %v573
      %v575 = vrot.slane %v439, 1
      %v576 = vsel %vm503, %v573, %v575
      %577 = vrot.lane.b32.xlu0 %v506, 4
      %v578 = vpop.permute.xlu0 %577
      %579 = vrot.lane.b32.xlu0 %v508, 4
      %v580 = vpop.permute.xlu0 %579
      %581 = vrot.lane.b32.xlu0 %v510, 4
      %v582 = vpop.permute.xlu0 %581
      %583 = vrot.lane.b32.xlu0 %v512, 4
      %v584 = vpop.permute.xlu0 %583
      %585 = vrot.lane.b32.xlu0 %v514, 4
      %v586 = vpop.permute.xlu0 %585
      %587 = vrot.lane.b32.xlu0 %v516, 4
      %v588 = vpop.permute.xlu0 %587
      %589 = vrot.lane.b32.xlu0 %v518, 4
      %v590 = vpop.permute.xlu0 %589
      %591 = vrot.lane.b32.xlu0 %v520, 4
      %v592 = vpop.permute.xlu0 %591
      %593 = vrot.lane.b32.xlu0 %v522, 4
      %v594 = vpop.permute.xlu0 %593
      %595 = vrot.lane.b32.xlu0 %v524, 4
      %v596 = vpop.permute.xlu0 %595
      %597 = vrot.lane.b32.xlu0 %v526, 4
      %v598 = vpop.permute.xlu0 %597
      %599 = vrot.lane.b32.xlu0 %v528, 4
      %v600 = vpop.permute.xlu0 %599
      %601 = vrot.lane.b32.xlu0 %v530, 4
      %v602 = vpop.permute.xlu0 %601
      %603 = vrot.lane.b32.xlu0 %v532, 4
      %v604 = vpop.permute.xlu0 %603
      %605 = vrot.lane.b32.xlu0 %v534, 4
      %v606 = vpop.permute.xlu0 %605
      %607 = vrot.lane.b32.xlu0 %v536, 4
      %v608 = vpop.permute.xlu0 %607
      %609 = vrot.lane.b32.xlu0 %v538, 4
      %v610 = vpop.permute.xlu0 %609
      %611 = vrot.lane.b32.xlu0 %v540, 4
      %v612 = vpop.permute.xlu0 %611
      %613 = vrot.lane.b32.xlu0 %v542, 4
      %v614 = vpop.permute.xlu0 %613
      %615 = vrot.lane.b32.xlu0 %v544, 4
      %v616 = vpop.permute.xlu0 %615
      %617 = vrot.lane.b32.xlu0 %v546, 4
      %v618 = vpop.permute.xlu0 %617
      %619 = vrot.lane.b32.xlu0 %v548, 4
      %v620 = vpop.permute.xlu0 %619
      %621 = vrot.lane.b32.xlu0 %v550, 4
      %v622 = vpop.permute.xlu0 %621
      %623 = vrot.lane.b32.xlu0 %v552, 4
      %v624 = vpop.permute.xlu0 %623
      %625 = vrot.lane.b32.xlu0 %v554, 4
      %v626 = vpop.permute.xlu0 %625
      %627 = vrot.lane.b32.xlu0 %v556, 4
      %v628 = vpop.permute.xlu0 %627
      %629 = vrot.lane.b32.xlu0 %v558, 4
      %v630 = vpop.permute.xlu0 %629
      %631 = vrot.lane.b32.xlu0 %v560, 4
      %v632 = vpop.permute.xlu0 %631
      %633 = vrot.lane.b32.xlu0 %v562, 4
      %v634 = vpop.permute.xlu0 %633
      %635 = vrot.lane.b32.xlu0 %v564, 4
      %v636 = vpop.permute.xlu0 %635
      %637 = vrot.lane.b32.xlu0 %v566, 4
      %v638 = vpop.permute.xlu0 %637
      %639 = vrot.lane.b32.xlu0 %v568, 4
      %v640 = vpop.permute.xlu0 %639
      %641 = vrot.lane.b32.xlu0 %v570, 4
      %v642 = vpop.permute.xlu0 %641
      %643 = vrot.lane.b32.xlu0 %v572, 4
      %v644 = vpop.permute.xlu0 %643
      %645 = vrot.lane.b32.xlu0 %v574, 4
      %v646 = vpop.permute.xlu0 %645
      %647 = vrot.lane.b32.xlu0 %v576, 4
      %v648 = vpop.permute.xlu0 %647
      %vm686 = vcmask 1045504
      %v687 = vrot.slane %v441, 2
      %v688 = vrot.slane %v403, 2
      %v689 = vsel %vm686, %v687, %v688
      %v690 = vrot.slane %v404, 2
      %v691 = vsel %vm686, %v688, %v690
      %v692 = vrot.slane %v405, 2
      %v693 = vsel %vm686, %v690, %v692
      %v694 = vrot.slane %v406, 2
      %v695 = vsel %vm686, %v692, %v694
      %v696 = vrot.slane %v407, 2
      %v697 = vsel %vm686, %v694, %v696
      %v698 = vrot.slane %v408, 2
      %v699 = vsel %vm686, %v696, %v698
      %v700 = vrot.slane %v409, 2
      %v701 = vsel %vm686, %v698, %v700
      %v702 = vrot.slane %v410, 2
      %v703 = vsel %vm686, %v700, %v702
      %v704 = vrot.slane %v411, 2
      %v705 = vsel %vm686, %v702, %v704
      %v706 = vrot.slane %v412, 2
      %v707 = vsel %vm686, %v704, %v706
      %v708 = vrot.slane %v413, 2
      %v709 = vsel %vm686, %v706, %v708
      %v710 = vrot.slane %v414, 2
      %v711 = vsel %vm686, %v708, %v710
      %v712 = vrot.slane %v415, 2
      %v713 = vsel %vm686, %v710, %v712
      %v714 = vrot.slane %v416, 2
      %v715 = vsel %vm686, %v712, %v714
      %v716 = vrot.slane %v417, 2
      %v717 = vsel %vm686, %v714, %v716
      %v718 = vrot.slane %v418, 2
      %v719 = vsel %vm686, %v716, %v718
      %v720 = vrot.slane %v419, 2
      %v721 = vsel %vm686, %v718, %v720
      %v722 = vrot.slane %v420, 2
      %v723 = vsel %vm686, %v720, %v722
      %v724 = vrot.slane %v421, 2
      %v725 = vsel %vm686, %v722, %v724
      %v726 = vrot.slane %v422, 2
      %v727 = vsel %vm686, %v724, %v726
      %v728 = vrot.slane %v423, 2
      %v729 = vsel %vm686, %v726, %v728
      %v730 = vrot.slane %v424, 2
      %v731 = vsel %vm686, %v728, %v730
      %v732 = vrot.slane %v425, 2
      %v733 = vsel %vm686, %v730, %v732
      %v734 = vrot.slane %v426, 2
      %v735 = vsel %vm686, %v732, %v734
      %v736 = vrot.slane %v427, 2
      %v737 = vsel %vm686, %v734, %v736
      %v738 = vrot.slane %v428, 2
      %v739 = vsel %vm686, %v736, %v738
      %v740 = vrot.slane %v429, 2
      %v741 = vsel %vm686, %v738, %v740
      %v742 = vrot.slane %v430, 2
      %v743 = vsel %vm686, %v740, %v742
      %v744 = vrot.slane %v431, 2
      %v745 = vsel %vm686, %v742, %v744
      %v746 = vrot.slane %v432, 2
      %v747 = vsel %vm686, %v744, %v746
      %v748 = vrot.slane %v433, 2
      %v749 = vsel %vm686, %v746, %v748
      %v750 = vrot.slane %v434, 2
      %v751 = vsel %vm686, %v748, %v750
      %v752 = vrot.slane %v435, 2
      %v753 = vsel %vm686, %v750, %v752
      %v754 = vrot.slane %v436, 2
      %v755 = vsel %vm686, %v752, %v754
      %v756 = vrot.slane %v437, 2
      %v757 = vsel %vm686, %v754, %v756
      %v758 = vrot.slane %v439, 2
      %v759 = vsel %vm686, %v756, %v758
      %760 = vrot.lane.b32.xlu0 %v689, 8
      %v761 = vpop.permute.xlu0 %760
      %762 = vrot.lane.b32.xlu0 %v691, 8
      %v763 = vpop.permute.xlu0 %762
      %764 = vrot.lane.b32.xlu0 %v693, 8
      %v765 = vpop.permute.xlu0 %764
      %766 = vrot.lane.b32.xlu0 %v695, 8
      %v767 = vpop.permute.xlu0 %766
      %768 = vrot.lane.b32.xlu0 %v697, 8
      %v769 = vpop.permute.xlu0 %768
      %770 = vrot.lane.b32.xlu0 %v699, 8
      %v771 = vpop.permute.xlu0 %770
      %772 = vrot.lane.b32.xlu0 %v701, 8
      %v773 = vpop.permute.xlu0 %772
      %774 = vrot.lane.b32.xlu0 %v703, 8
      %v775 = vpop.permute.xlu0 %774
      %776 = vrot.lane.b32.xlu0 %v705, 8
      %v777 = vpop.permute.xlu0 %776
      %778 = vrot.lane.b32.xlu0 %v707, 8
      %v779 = vpop.permute.xlu0 %778
      %780 = vrot.lane.b32.xlu0 %v709, 8
      %v781 = vpop.permute.xlu0 %780
      %782 = vrot.lane.b32.xlu0 %v711, 8
      %v783 = vpop.permute.xlu0 %782
      %784 = vrot.lane.b32.xlu0 %v713, 8
      %v785 = vpop.permute.xlu0 %784
      %786 = vrot.lane.b32.xlu0 %v715, 8
      %v787 = vpop.permute.xlu0 %786
      %788 = vrot.lane.b32.xlu0 %v717, 8
      %v789 = vpop.permute.xlu0 %788
      %790 = vrot.lane.b32.xlu0 %v719, 8
      %v791 = vpop.permute.xlu0 %790
      %792 = vrot.lane.b32.xlu0 %v721, 8
      %v793 = vpop.permute.xlu0 %792
      %794 = vrot.lane.b32.xlu0 %v723, 8
      %v795 = vpop.permute.xlu0 %794
      %796 = vrot.lane.b32.xlu0 %v725, 8
      %v797 = vpop.permute.xlu0 %796
      %798 = vrot.lane.b32.xlu0 %v727, 8
      %v799 = vpop.permute.xlu0 %798
      %800 = vrot.lane.b32.xlu0 %v729, 8
      %v801 = vpop.permute.xlu0 %800
      %802 = vrot.lane.b32.xlu0 %v731, 8
      %v803 = vpop.permute.xlu0 %802
      %804 = vrot.lane.b32.xlu0 %v733, 8
      %v805 = vpop.permute.xlu0 %804
      %806 = vrot.lane.b32.xlu0 %v735, 8
      %v807 = vpop.permute.xlu0 %806
      %808 = vrot.lane.b32.xlu0 %v737, 8
      %v809 = vpop.permute.xlu0 %808
      %810 = vrot.lane.b32.xlu0 %v739, 8
      %v811 = vpop.permute.xlu0 %810
      %812 = vrot.lane.b32.xlu0 %v741, 8
      %v813 = vpop.permute.xlu0 %812
      %814 = vrot.lane.b32.xlu0 %v743, 8
      %v815 = vpop.permute.xlu0 %814
      %816 = vrot.lane.b32.xlu0 %v745, 8
      %v817 = vpop.permute.xlu0 %816
      %818 = vrot.lane.b32.xlu0 %v747, 8
      %v819 = vpop.permute.xlu0 %818
      %820 = vrot.lane.b32.xlu0 %v749, 8
      %v821 = vpop.permute.xlu0 %820
      %822 = vrot.lane.b32.xlu0 %v751, 8
      %v823 = vpop.permute.xlu0 %822
      %824 = vrot.lane.b32.xlu0 %v753, 8
      %v825 = vpop.permute.xlu0 %824
      %826 = vrot.lane.b32.xlu0 %v755, 8
      %v827 = vpop.permute.xlu0 %826
      %828 = vrot.lane.b32.xlu0 %v757, 8
      %v829 = vpop.permute.xlu0 %828
      %830 = vrot.lane.b32.xlu0 %v759, 8
      %v831 = vpop.permute.xlu0 %830
      %v872 = vrot.slane %v446, 2
      %v873 = vsel %vm686, %v872, %v692
      %v874 = vrot.slane %v447, 2
      %v875 = vsel %vm686, %v756, %v874
      %v876 = vrot.slane %v448, 2
      %v877 = vsel %vm686, %v874, %v876
      %v878 = vrot.slane %v449, 2
      %v879 = vsel %vm686, %v876, %v878
      %880 = vrot.lane.b32.xlu0 %v873, 12
      %v881 = vpop.permute.xlu0 %880
      %882 = vrot.lane.b32.xlu0 %v695, 12
      %v883 = vpop.permute.xlu0 %882
      %884 = vrot.lane.b32.xlu0 %v697, 12
      %v885 = vpop.permute.xlu0 %884
      %886 = vrot.lane.b32.xlu0 %v699, 12
      %v887 = vpop.permute.xlu0 %886
      %888 = vrot.lane.b32.xlu0 %v701, 12
      %v889 = vpop.permute.xlu0 %888
      %890 = vrot.lane.b32.xlu0 %v703, 12
      %v891 = vpop.permute.xlu0 %890
      %892 = vrot.lane.b32.xlu0 %v705, 12
      %v893 = vpop.permute.xlu0 %892
      %894 = vrot.lane.b32.xlu0 %v707, 12
      %v895 = vpop.permute.xlu0 %894
      %896 = vrot.lane.b32.xlu0 %v709, 12
      %v897 = vpop.permute.xlu0 %896
      %898 = vrot.lane.b32.xlu0 %v711, 12
      %v899 = vpop.permute.xlu0 %898
      %900 = vrot.lane.b32.xlu0 %v713, 12
      %v901 = vpop.permute.xlu0 %900
      %902 = vrot.lane.b32.xlu0 %v715, 12
      %v903 = vpop.permute.xlu0 %902
      %904 = vrot.lane.b32.xlu0 %v717, 12
      %v905 = vpop.permute.xlu0 %904
      %906 = vrot.lane.b32.xlu0 %v719, 12
      %v907 = vpop.permute.xlu0 %906
      %908 = vrot.lane.b32.xlu0 %v721, 12
      %v909 = vpop.permute.xlu0 %908
      %910 = vrot.lane.b32.xlu0 %v723, 12
      %v911 = vpop.permute.xlu0 %910
      %912 = vrot.lane.b32.xlu0 %v725, 12
      %v913 = vpop.permute.xlu0 %912
      %914 = vrot.lane.b32.xlu0 %v727, 12
      %v915 = vpop.permute.xlu0 %914
      %916 = vrot.lane.b32.xlu0 %v729, 12
      %v917 = vpop.permute.xlu0 %916
      %918 = vrot.lane.b32.xlu0 %v731, 12
      %v919 = vpop.permute.xlu0 %918
      %920 = vrot.lane.b32.xlu0 %v733, 12
      %v921 = vpop.permute.xlu0 %920
      %922 = vrot.lane.b32.xlu0 %v735, 12
      %v923 = vpop.permute.xlu0 %922
      %924 = vrot.lane.b32.xlu0 %v737, 12
      %v925 = vpop.permute.xlu0 %924
      %926 = vrot.lane.b32.xlu0 %v739, 12
      %v927 = vpop.permute.xlu0 %926
      %928 = vrot.lane.b32.xlu0 %v741, 12
      %v929 = vpop.permute.xlu0 %928
      %930 = vrot.lane.b32.xlu0 %v743, 12
      %v931 = vpop.permute.xlu0 %930
      %932 = vrot.lane.b32.xlu0 %v745, 12
      %v933 = vpop.permute.xlu0 %932
      %934 = vrot.lane.b32.xlu0 %v747, 12
      %v935 = vpop.permute.xlu0 %934
      %936 = vrot.lane.b32.xlu0 %v749, 12
      %v937 = vpop.permute.xlu0 %936
      %938 = vrot.lane.b32.xlu0 %v751, 12
      %v939 = vpop.permute.xlu0 %938
      %940 = vrot.lane.b32.xlu0 %v753, 12
      %v941 = vpop.permute.xlu0 %940
      %942 = vrot.lane.b32.xlu0 %v755, 12
      %v943 = vpop.permute.xlu0 %942
      %944 = vrot.lane.b32.xlu0 %v757, 12
      %v945 = vpop.permute.xlu0 %944
      %946 = vrot.lane.b32.xlu0 %v875, 12
      %v947 = vpop.permute.xlu0 %946
      %948 = vrot.lane.b32.xlu0 %v877, 12
      %v949 = vpop.permute.xlu0 %948
      %950 = vrot.lane.b32.xlu0 %v879, 12
      %v951 = vpop.permute.xlu0 %950
      %vm989 = vcmask 1044480
      %v990 = vrot.slane %v446, 3
      %v991 = vrot.slane %v405, 3
      %v992 = vsel %vm989, %v990, %v991
      %v993 = vrot.slane %v406, 3
      %v994 = vsel %vm989, %v991, %v993
      %v995 = vrot.slane %v407, 3
      %v996 = vsel %vm989, %v993, %v995
      %v997 = vrot.slane %v408, 3
      %v998 = vsel %vm989, %v995, %v997
      %v999 = vrot.slane %v409, 3
      %v1000 = vsel %vm989, %v997, %v999
      %v1001 = vrot.slane %v410, 3
      %v1002 = vsel %vm989, %v999, %v1001
      %v1003 = vrot.slane %v411, 3
      %v1004 = vsel %vm989, %v1001, %v1003
      %v1005 = vrot.slane %v412, 3
      %v1006 = vsel %vm989, %v1003, %v1005
      %v1007 = vrot.slane %v413, 3
      %v1008 = vsel %vm989, %v1005, %v1007
      %v1009 = vrot.slane %v414, 3
      %v1010 = vsel %vm989, %v1007, %v1009
      %v1011 = vrot.slane %v415, 3
      %v1012 = vsel %vm989, %v1009, %v1011
      %v1013 = vrot.slane %v416, 3
      %v1014 = vsel %vm989, %v1011, %v1013
      %v1015 = vrot.slane %v417, 3
      %v1016 = vsel %vm989, %v1013, %v1015
      %v1017 = vrot.slane %v418, 3
      %v1018 = vsel %vm989, %v1015, %v1017
      %v1019 = vrot.slane %v419, 3
      %v1020 = vsel %vm989, %v1017, %v1019
      %v1021 = vrot.slane %v420, 3
      %v1022 = vsel %vm989, %v1019, %v1021
      %v1023 = vrot.slane %v421, 3
      %v1024 = vsel %vm989, %v1021, %v1023
      %v1025 = vrot.slane %v422, 3
      %v1026 = vsel %vm989, %v1023, %v1025
      %v1027 = vrot.slane %v423, 3
      %v1028 = vsel %vm989, %v1025, %v1027
      %v1029 = vrot.slane %v424, 3
      %v1030 = vsel %vm989, %v1027, %v1029
      %v1031 = vrot.slane %v425, 3
      %v1032 = vsel %vm989, %v1029, %v1031
      %v1033 = vrot.slane %v426, 3
      %v1034 = vsel %vm989, %v1031, %v1033
      %v1035 = vrot.slane %v427, 3
      %v1036 = vsel %vm989, %v1033, %v1035
      %v1037 = vrot.slane %v428, 3
      %v1038 = vsel %vm989, %v1035, %v1037
      %v1039 = vrot.slane %v429, 3
      %v1040 = vsel %vm989, %v1037, %v1039
      %v1041 = vrot.slane %v430, 3
      %v1042 = vsel %vm989, %v1039, %v1041
      %v1043 = vrot.slane %v431, 3
      %v1044 = vsel %vm989, %v1041, %v1043
      %v1045 = vrot.slane %v432, 3
      %v1046 = vsel %vm989, %v1043, %v1045
      %v1047 = vrot.slane %v433, 3
      %v1048 = vsel %vm989, %v1045, %v1047
      %v1049 = vrot.slane %v434, 3
      %v1050 = vsel %vm989, %v1047, %v1049
      %v1051 = vrot.slane %v435, 3
      %v1052 = vsel %vm989, %v1049, %v1051
      %v1053 = vrot.slane %v436, 3
      %v1054 = vsel %vm989, %v1051, %v1053
      %v1055 = vrot.slane %v437, 3
      %v1056 = vsel %vm989, %v1053, %v1055
      %v1057 = vrot.slane %v447, 3
      %v1058 = vsel %vm989, %v1055, %v1057
      %v1059 = vrot.slane %v448, 3
      %v1060 = vsel %vm989, %v1057, %v1059
      %v1061 = vrot.slane %v451, 3
      %v1062 = vsel %vm989, %v1059, %v1061
      %1063 = vrot.lane.b32.xlu0 %v992, 16
      %v1064 = vpop.permute.xlu0 %1063
      %1065 = vrot.lane.b32.xlu0 %v994, 16
      %v1066 = vpop.permute.xlu0 %1065
      %1067 = vrot.lane.b32.xlu0 %v996, 16
      %v1068 = vpop.permute.xlu0 %1067
      %1069 = vrot.lane.b32.xlu0 %v998, 16
      %v1070 = vpop.permute.xlu0 %1069
      %1071 = vrot.lane.b32.xlu0 %v1000, 16
      %v1072 = vpop.permute.xlu0 %1071
      %1073 = vrot.lane.b32.xlu0 %v1002, 16
      %v1074 = vpop.permute.xlu0 %1073
      %1075 = vrot.lane.b32.xlu0 %v1004, 16
      %v1076 = vpop.permute.xlu0 %1075
      %1077 = vrot.lane.b32.xlu0 %v1006, 16
      %v1078 = vpop.permute.xlu0 %1077
      %1079 = vrot.lane.b32.xlu0 %v1008, 16
      %v1080 = vpop.permute.xlu0 %1079
      %1081 = vrot.lane.b32.xlu0 %v1010, 16
      %v1082 = vpop.permute.xlu0 %1081
      %1083 = vrot.lane.b32.xlu0 %v1012, 16
      %v1084 = vpop.permute.xlu0 %1083
      %1085 = vrot.lane.b32.xlu0 %v1014, 16
      %v1086 = vpop.permute.xlu0 %1085
      %1087 = vrot.lane.b32.xlu0 %v1016, 16
      %v1088 = vpop.permute.xlu0 %1087
      %1089 = vrot.lane.b32.xlu0 %v1018, 16
      %v1090 = vpop.permute.xlu0 %1089
      %1091 = vrot.lane.b32.xlu0 %v1020, 16
      %v1092 = vpop.permute.xlu0 %1091
      %1093 = vrot.lane.b32.xlu0 %v1022, 16
      %v1094 = vpop.permute.xlu0 %1093
      %1095 = vrot.lane.b32.xlu0 %v1024, 16
      %v1096 = vpop.permute.xlu0 %1095
      %1097 = vrot.lane.b32.xlu0 %v1026, 16
      %v1098 = vpop.permute.xlu0 %1097
      %1099 = vrot.lane.b32.xlu0 %v1028, 16
      %v1100 = vpop.permute.xlu0 %1099
      %1101 = vrot.lane.b32.xlu0 %v1030, 16
      %v1102 = vpop.permute.xlu0 %1101
      %1103 = vrot.lane.b32.xlu0 %v1032, 16
      %v1104 = vpop.permute.xlu0 %1103
      %1105 = vrot.lane.b32.xlu0 %v1034, 16
      %v1106 = vpop.permute.xlu0 %1105
      %1107 = vrot.lane.b32.xlu0 %v1036, 16
      %v1108 = vpop.permute.xlu0 %1107
      %1109 = vrot.lane.b32.xlu0 %v1038, 16
      %v1110 = vpop.permute.xlu0 %1109
      %1111 = vrot.lane.b32.xlu0 %v1040, 16
      %v1112 = vpop.permute.xlu0 %1111
      %1113 = vrot.lane.b32.xlu0 %v1042, 16
      %v1114 = vpop.permute.xlu0 %1113
      %1115 = vrot.lane.b32.xlu0 %v1044, 16
      %v1116 = vpop.permute.xlu0 %1115
      %1117 = vrot.lane.b32.xlu0 %v1046, 16
      %v1118 = vpop.permute.xlu0 %1117
      %1119 = vrot.lane.b32.xlu0 %v1048, 16
      %v1120 = vpop.permute.xlu0 %1119
      %1121 = vrot.lane.b32.xlu0 %v1050, 16
      %v1122 = vpop.permute.xlu0 %1121
      %1123 = vrot.lane.b32.xlu0 %v1052, 16
      %v1124 = vpop.permute.xlu0 %1123
      %1125 = vrot.lane.b32.xlu0 %v1054, 16
      %v1126 = vpop.permute.xlu0 %1125
      %1127 = vrot.lane.b32.xlu0 %v1056, 16
      %v1128 = vpop.permute.xlu0 %1127
      %1129 = vrot.lane.b32.xlu0 %v1058, 16
      %v1130 = vpop.permute.xlu0 %1129
      %1131 = vrot.lane.b32.xlu0 %v1060, 16
      %v1132 = vpop.permute.xlu0 %1131
      %1133 = vrot.lane.b32.xlu0 %v1062, 16
      %v1134 = vpop.permute.xlu0 %1133
      %vm1172 = vcmask 1043456
      %v1173 = vrot.slane %v453, 4
      %v1174 = vrot.slane %v405, 4
      %v1175 = vsel %vm1172, %v1173, %v1174
      %v1176 = vrot.slane %v406, 4
      %v1177 = vsel %vm1172, %v1174, %v1176
      %v1178 = vrot.slane %v407, 4
      %v1179 = vsel %vm1172, %v1176, %v1178
      %v1180 = vrot.slane %v408, 4
      %v1181 = vsel %vm1172, %v1178, %v1180
      %v1182 = vrot.slane %v409, 4
      %v1183 = vsel %vm1172, %v1180, %v1182
      %v1184 = vrot.slane %v410, 4
      %v1185 = vsel %vm1172, %v1182, %v1184
      %v1186 = vrot.slane %v411, 4
      %v1187 = vsel %vm1172, %v1184, %v1186
      %v1188 = vrot.slane %v412, 4
      %v1189 = vsel %vm1172, %v1186, %v1188
      %v1190 = vrot.slane %v413, 4
      %v1191 = vsel %vm1172, %v1188, %v1190
      %v1192 = vrot.slane %v414, 4
      %v1193 = vsel %vm1172, %v1190, %v1192
      %v1194 = vrot.slane %v415, 4
      %v1195 = vsel %vm1172, %v1192, %v1194
      %v1196 = vrot.slane %v416, 4
      %v1197 = vsel %vm1172, %v1194, %v1196
      %v1198 = vrot.slane %v417, 4
      %v1199 = vsel %vm1172, %v1196, %v1198
      %v1200 = vrot.slane %v418, 4
      %v1201 = vsel %vm1172, %v1198, %v1200
      %v1202 = vrot.slane %v419, 4
      %v1203 = vsel %vm1172, %v1200, %v1202
      %v1204 = vrot.slane %v420, 4
      %v1205 = vsel %vm1172, %v1202, %v1204
      %v1206 = vrot.slane %v421, 4
      %v1207 = vsel %vm1172, %v1204, %v1206
      %v1208 = vrot.slane %v422, 4
      %v1209 = vsel %vm1172, %v1206, %v1208
      %v1210 = vrot.slane %v423, 4
      %v1211 = vsel %vm1172, %v1208, %v1210
      %v1212 = vrot.slane %v424, 4
      %v1213 = vsel %vm1172, %v1210, %v1212
      %v1214 = vrot.slane %v425, 4
      %v1215 = vsel %vm1172, %v1212, %v1214
      %v1216 = vrot.slane %v426, 4
      %v1217 = vsel %vm1172, %v1214, %v1216
      %v1218 = vrot.slane %v427, 4
      %v1219 = vsel %vm1172, %v1216, %v1218
      %v1220 = vrot.slane %v428, 4
      %v1221 = vsel %vm1172, %v1218, %v1220
      %v1222 = vrot.slane %v429, 4
      %v1223 = vsel %vm1172, %v1220, %v1222
      %v1224 = vrot.slane %v430, 4
      %v1225 = vsel %vm1172, %v1222, %v1224
      %v1226 = vrot.slane %v431, 4
      %v1227 = vsel %vm1172, %v1224, %v1226
      %v1228 = vrot.slane %v432, 4
      %v1229 = vsel %vm1172, %v1226, %v1228
      %v1230 = vrot.slane %v433, 4
      %v1231 = vsel %vm1172, %v1228, %v1230
      %v1232 = vrot.slane %v434, 4
      %v1233 = vsel %vm1172, %v1230, %v1232
      %v1234 = vrot.slane %v435, 4
      %v1235 = vsel %vm1172, %v1232, %v1234
      %v1236 = vrot.slane %v436, 4
      %v1237 = vsel %vm1172, %v1234, %v1236
      %v1238 = vrot.slane %v437, 4
      %v1239 = vsel %vm1172, %v1236, %v1238
      %v1240 = vrot.slane %v447, 4
      %v1241 = vsel %vm1172, %v1238, %v1240
      %v1242 = vrot.slane %v448, 4
      %v1243 = vsel %vm1172, %v1240, %v1242
      %v1244 = vrot.slane %v451, 4
      %v1245 = vsel %vm1172, %v1242, %v1244
      %1246 = vrot.lane.b32.xlu0 %v1175, 20
      %v1247 = vpop.permute.xlu0 %1246
      %1248 = vrot.lane.b32.xlu0 %v1177, 20
      %v1249 = vpop.permute.xlu0 %1248
      %1250 = vrot.lane.b32.xlu0 %v1179, 20
      %v1251 = vpop.permute.xlu0 %1250
      %1252 = vrot.lane.b32.xlu0 %v1181, 20
      %v1253 = vpop.permute.xlu0 %1252
      %1254 = vrot.lane.b32.xlu0 %v1183, 20
      %v1255 = vpop.permute.xlu0 %1254
      %1256 = vrot.lane.b32.xlu0 %v1185, 20
      %v1257 = vpop.permute.xlu0 %1256
      %1258 = vrot.lane.b32.xlu0 %v1187, 20
      %v1259 = vpop.permute.xlu0 %1258
      %1260 = vrot.lane.b32.xlu0 %v1189, 20
      %v1261 = vpop.permute.xlu0 %1260
      %1262 = vrot.lane.b32.xlu0 %v1191, 20
      %v1263 = vpop.permute.xlu0 %1262
      %1264 = vrot.lane.b32.xlu0 %v1193, 20
      %v1265 = vpop.permute.xlu0 %1264
      %1266 = vrot.lane.b32.xlu0 %v1195, 20
      %v1267 = vpop.permute.xlu0 %1266
      %1268 = vrot.lane.b32.xlu0 %v1197, 20
      %v1269 = vpop.permute.xlu0 %1268
      %1270 = vrot.lane.b32.xlu0 %v1199, 20
      %v1271 = vpop.permute.xlu0 %1270
      %1272 = vrot.lane.b32.xlu0 %v1201, 20
      %v1273 = vpop.permute.xlu0 %1272
      %1274 = vrot.lane.b32.xlu0 %v1203, 20
      %v1275 = vpop.permute.xlu0 %1274
      %1276 = vrot.lane.b32.xlu0 %v1205, 20
      %v1277 = vpop.permute.xlu0 %1276
      %1278 = vrot.lane.b32.xlu0 %v1207, 20
      %v1279 = vpop.permute.xlu0 %1278
      %1280 = vrot.lane.b32.xlu0 %v1209, 20
      %v1281 = vpop.permute.xlu0 %1280
      %1282 = vrot.lane.b32.xlu0 %v1211, 20
      %v1283 = vpop.permute.xlu0 %1282
      %1284 = vrot.lane.b32.xlu0 %v1213, 20
      %v1285 = vpop.permute.xlu0 %1284
      %1286 = vrot.lane.b32.xlu0 %v1215, 20
      %v1287 = vpop.permute.xlu0 %1286
      %1288 = vrot.lane.b32.xlu0 %v1217, 20
      %v1289 = vpop.permute.xlu0 %1288
      %1290 = vrot.lane.b32.xlu0 %v1219, 20
      %v1291 = vpop.permute.xlu0 %1290
      %1292 = vrot.lane.b32.xlu0 %v1221, 20
      %v1293 = vpop.permute.xlu0 %1292
      %1294 = vrot.lane.b32.xlu0 %v1223, 20
      %v1295 = vpop.permute.xlu0 %1294
      %1296 = vrot.lane.b32.xlu0 %v1225, 20
      %v1297 = vpop.permute.xlu0 %1296
      %1298 = vrot.lane.b32.xlu0 %v1227, 20
      %v1299 = vpop.permute.xlu0 %1298
      %1300 = vrot.lane.b32.xlu0 %v1229, 20
      %v1301 = vpop.permute.xlu0 %1300
      %1302 = vrot.lane.b32.xlu0 %v1231, 20
      %v1303 = vpop.permute.xlu0 %1302
      %1304 = vrot.lane.b32.xlu0 %v1233, 20
      %v1305 = vpop.permute.xlu0 %1304
      %1306 = vrot.lane.b32.xlu0 %v1235, 20
      %v1307 = vpop.permute.xlu0 %1306
      %1308 = vrot.lane.b32.xlu0 %v1237, 20
      %v1309 = vpop.permute.xlu0 %1308
      %1310 = vrot.lane.b32.xlu0 %v1239, 20
      %v1311 = vpop.permute.xlu0 %1310
      %1312 = vrot.lane.b32.xlu0 %v1241, 20
      %v1313 = vpop.permute.xlu0 %1312
      %1314 = vrot.lane.b32.xlu0 %v1243, 20
      %v1315 = vpop.permute.xlu0 %1314
      %1316 = vrot.lane.b32.xlu0 %v1245, 20
      %v1317 = vpop.permute.xlu0 %1316
      %v1358 = vrot.slane %v458, 4
      %v1359 = vsel %vm1172, %v1358, %v1178
      %v1360 = vrot.slane %v459, 4
      %v1361 = vsel %vm1172, %v1242, %v1360
      %v1362 = vrot.slane %v460, 4
      %v1363 = vsel %vm1172, %v1360, %v1362
      %v1364 = vrot.slane %v461, 4
      %v1365 = vsel %vm1172, %v1362, %v1364
      %1366 = vrot.lane.b32.xlu0 %v1359, 24
      %v1367 = vpop.permute.xlu0 %1366
      %1368 = vrot.lane.b32.xlu0 %v1181, 24
      %v1369 = vpop.permute.xlu0 %1368
      %1370 = vrot.lane.b32.xlu0 %v1183, 24
      %v1371 = vpop.permute.xlu0 %1370
      %1372 = vrot.lane.b32.xlu0 %v1185, 24
      %v1373 = vpop.permute.xlu0 %1372
      %1374 = vrot.lane.b32.xlu0 %v1187, 24
      %v1375 = vpop.permute.xlu0 %1374
      %1376 = vrot.lane.b32.xlu0 %v1189, 24
      %v1377 = vpop.permute.xlu0 %1376
      %1378 = vrot.lane.b32.xlu0 %v1191, 24
      %v1379 = vpop.permute.xlu0 %1378
      %1380 = vrot.lane.b32.xlu0 %v1193, 24
      %v1381 = vpop.permute.xlu0 %1380
      %1382 = vrot.lane.b32.xlu0 %v1195, 24
      %v1383 = vpop.permute.xlu0 %1382
      %1384 = vrot.lane.b32.xlu0 %v1197, 24
      %v1385 = vpop.permute.xlu0 %1384
      %1386 = vrot.lane.b32.xlu0 %v1199, 24
      %v1387 = vpop.permute.xlu0 %1386
      %1388 = vrot.lane.b32.xlu0 %v1201, 24
      %v1389 = vpop.permute.xlu0 %1388
      %1390 = vrot.lane.b32.xlu0 %v1203, 24
      %v1391 = vpop.permute.xlu0 %1390
      %1392 = vrot.lane.b32.xlu0 %v1205, 24
      %v1393 = vpop.permute.xlu0 %1392
      %1394 = vrot.lane.b32.xlu0 %v1207, 24
      %v1395 = vpop.permute.xlu0 %1394
      %1396 = vrot.lane.b32.xlu0 %v1209, 24
      %v1397 = vpop.permute.xlu0 %1396
      %1398 = vrot.lane.b32.xlu0 %v1211, 24
      %v1399 = vpop.permute.xlu0 %1398
      %1400 = vrot.lane.b32.xlu0 %v1213, 24
      %v1401 = vpop.permute.xlu0 %1400
      %1402 = vrot.lane.b32.xlu0 %v1215, 24
      %v1403 = vpop.permute.xlu0 %1402
      %1404 = vrot.lane.b32.xlu0 %v1217, 24
      %v1405 = vpop.permute.xlu0 %1404
      %1406 = vrot.lane.b32.xlu0 %v1219, 24
      %v1407 = vpop.permute.xlu0 %1406
      %1408 = vrot.lane.b32.xlu0 %v1221, 24
      %v1409 = vpop.permute.xlu0 %1408
      %1410 = vrot.lane.b32.xlu0 %v1223, 24
      %v1411 = vpop.permute.xlu0 %1410
      %1412 = vrot.lane.b32.xlu0 %v1225, 24
      %v1413 = vpop.permute.xlu0 %1412
      %1414 = vrot.lane.b32.xlu0 %v1227, 24
      %v1415 = vpop.permute.xlu0 %1414
      %1416 = vrot.lane.b32.xlu0 %v1229, 24
      %v1417 = vpop.permute.xlu0 %1416
      %1418 = vrot.lane.b32.xlu0 %v1231, 24
      %v1419 = vpop.permute.xlu0 %1418
      %1420 = vrot.lane.b32.xlu0 %v1233, 24
      %v1421 = vpop.permute.xlu0 %1420
      %1422 = vrot.lane.b32.xlu0 %v1235, 24
      %v1423 = vpop.permute.xlu0 %1422
      %1424 = vrot.lane.b32.xlu0 %v1237, 24
      %v1425 = vpop.permute.xlu0 %1424
      %1426 = vrot.lane.b32.xlu0 %v1239, 24
      %v1427 = vpop.permute.xlu0 %1426
      %1428 = vrot.lane.b32.xlu0 %v1241, 24
      %v1429 = vpop.permute.xlu0 %1428
      %1430 = vrot.lane.b32.xlu0 %v1243, 24
      %v1431 = vpop.permute.xlu0 %1430
      %1432 = vrot.lane.b32.xlu0 %v1361, 24
      %v1433 = vpop.permute.xlu0 %1432
      %1434 = vrot.lane.b32.xlu0 %v1363, 24
      %v1435 = vpop.permute.xlu0 %1434
      %1436 = vrot.lane.b32.xlu0 %v1365, 24
      %v1437 = vpop.permute.xlu0 %1436
      %vm1475 = vcmask 1042432
      %v1476 = vrot.slane %v458, 5
      %v1477 = vrot.slane %v407, 5
      %v1478 = vsel %vm1475, %v1476, %v1477
      %v1479 = vrot.slane %v408, 5
      %v1480 = vsel %vm1475, %v1477, %v1479
      %v1481 = vrot.slane %v409, 5
      %v1482 = vsel %vm1475, %v1479, %v1481
      %v1483 = vrot.slane %v410, 5
      %v1484 = vsel %vm1475, %v1481, %v1483
      %v1485 = vrot.slane %v411, 5
      %v1486 = vsel %vm1475, %v1483, %v1485
      %v1487 = vrot.slane %v412, 5
      %v1488 = vsel %vm1475, %v1485, %v1487
      %v1489 = vrot.slane %v413, 5
      %v1490 = vsel %vm1475, %v1487, %v1489
      %v1491 = vrot.slane %v414, 5
      %v1492 = vsel %vm1475, %v1489, %v1491
      %v1493 = vrot.slane %v415, 5
      %v1494 = vsel %vm1475, %v1491, %v1493
      %v1495 = vrot.slane %v416, 5
      %v1496 = vsel %vm1475, %v1493, %v1495
      %v1497 = vrot.slane %v417, 5
      %v1498 = vsel %vm1475, %v1495, %v1497
      %v1499 = vrot.slane %v418, 5
      %v1500 = vsel %vm1475, %v1497, %v1499
      %v1501 = vrot.slane %v419, 5
      %v1502 = vsel %vm1475, %v1499, %v1501
      %v1503 = vrot.slane %v420, 5
      %v1504 = vsel %vm1475, %v1501, %v1503
      %v1505 = vrot.slane %v421, 5
      %v1506 = vsel %vm1475, %v1503, %v1505
      %v1507 = vrot.slane %v422, 5
      %v1508 = vsel %vm1475, %v1505, %v1507
      %v1509 = vrot.slane %v423, 5
      %v1510 = vsel %vm1475, %v1507, %v1509
      %v1511 = vrot.slane %v424, 5
      %v1512 = vsel %vm1475, %v1509, %v1511
      %v1513 = vrot.slane %v425, 5
      %v1514 = vsel %vm1475, %v1511, %v1513
      %v1515 = vrot.slane %v426, 5
      %v1516 = vsel %vm1475, %v1513, %v1515
      %v1517 = vrot.slane %v427, 5
      %v1518 = vsel %vm1475, %v1515, %v1517
      %v1519 = vrot.slane %v428, 5
      %v1520 = vsel %vm1475, %v1517, %v1519
      %v1521 = vrot.slane %v429, 5
      %v1522 = vsel %vm1475, %v1519, %v1521
      %v1523 = vrot.slane %v430, 5
      %v1524 = vsel %vm1475, %v1521, %v1523
      %v1525 = vrot.slane %v431, 5
      %v1526 = vsel %vm1475, %v1523, %v1525
      %v1527 = vrot.slane %v432, 5
      %v1528 = vsel %vm1475, %v1525, %v1527
      %v1529 = vrot.slane %v433, 5
      %v1530 = vsel %vm1475, %v1527, %v1529
      %v1531 = vrot.slane %v434, 5
      %v1532 = vsel %vm1475, %v1529, %v1531
      %v1533 = vrot.slane %v435, 5
      %v1534 = vsel %vm1475, %v1531, %v1533
      %v1535 = vrot.slane %v436, 5
      %v1536 = vsel %vm1475, %v1533, %v1535
      %v1537 = vrot.slane %v437, 5
      %v1538 = vsel %vm1475, %v1535, %v1537
      %v1539 = vrot.slane %v447, 5
      %v1540 = vsel %vm1475, %v1537, %v1539
      %v1541 = vrot.slane %v448, 5
      %v1542 = vsel %vm1475, %v1539, %v1541
      %v1543 = vrot.slane %v459, 5
      %v1544 = vsel %vm1475, %v1541, %v1543
      %v1545 = vrot.slane %v460, 5
      %v1546 = vsel %vm1475, %v1543, %v1545
      %v1547 = vrot.slane %v463, 5
      %v1548 = vsel %vm1475, %v1545, %v1547
      %1549 = vrot.lane.b32.xlu0 %v1478, 28
      %v1550 = vpop.permute.xlu0 %1549
      %1551 = vrot.lane.b32.xlu0 %v1480, 28
      %v1552 = vpop.permute.xlu0 %1551
      %1553 = vrot.lane.b32.xlu0 %v1482, 28
      %v1554 = vpop.permute.xlu0 %1553
      %1555 = vrot.lane.b32.xlu0 %v1484, 28
      %v1556 = vpop.permute.xlu0 %1555
      %1557 = vrot.lane.b32.xlu0 %v1486, 28
      %v1558 = vpop.permute.xlu0 %1557
      %1559 = vrot.lane.b32.xlu0 %v1488, 28
      %v1560 = vpop.permute.xlu0 %1559
      %1561 = vrot.lane.b32.xlu0 %v1490, 28
      %v1562 = vpop.permute.xlu0 %1561
      %1563 = vrot.lane.b32.xlu0 %v1492, 28
      %v1564 = vpop.permute.xlu0 %1563
      %1565 = vrot.lane.b32.xlu0 %v1494, 28
      %v1566 = vpop.permute.xlu0 %1565
      %1567 = vrot.lane.b32.xlu0 %v1496, 28
      %v1568 = vpop.permute.xlu0 %1567
      %1569 = vrot.lane.b32.xlu0 %v1498, 28
      %v1570 = vpop.permute.xlu0 %1569
      %1571 = vrot.lane.b32.xlu0 %v1500, 28
      %v1572 = vpop.permute.xlu0 %1571
      %1573 = vrot.lane.b32.xlu0 %v1502, 28
      %v1574 = vpop.permute.xlu0 %1573
      %1575 = vrot.lane.b32.xlu0 %v1504, 28
      %v1576 = vpop.permute.xlu0 %1575
      %1577 = vrot.lane.b32.xlu0 %v1506, 28
      %v1578 = vpop.permute.xlu0 %1577
      %1579 = vrot.lane.b32.xlu0 %v1508, 28
      %v1580 = vpop.permute.xlu0 %1579
      %1581 = vrot.lane.b32.xlu0 %v1510, 28
      %v1582 = vpop.permute.xlu0 %1581
      %1583 = vrot.lane.b32.xlu0 %v1512, 28
      %v1584 = vpop.permute.xlu0 %1583
      %1585 = vrot.lane.b32.xlu0 %v1514, 28
      %v1586 = vpop.permute.xlu0 %1585
      %1587 = vrot.lane.b32.xlu0 %v1516, 28
      %v1588 = vpop.permute.xlu0 %1587
      %1589 = vrot.lane.b32.xlu0 %v1518, 28
      %v1590 = vpop.permute.xlu0 %1589
      %1591 = vrot.lane.b32.xlu0 %v1520, 28
      %v1592 = vpop.permute.xlu0 %1591
      %1593 = vrot.lane.b32.xlu0 %v1522, 28
      %v1594 = vpop.permute.xlu0 %1593
      %1595 = vrot.lane.b32.xlu0 %v1524, 28
      %v1596 = vpop.permute.xlu0 %1595
      %1597 = vrot.lane.b32.xlu0 %v1526, 28
      %v1598 = vpop.permute.xlu0 %1597
      %1599 = vrot.lane.b32.xlu0 %v1528, 28
      %v1600 = vpop.permute.xlu0 %1599
      %1601 = vrot.lane.b32.xlu0 %v1530, 28
      %v1602 = vpop.permute.xlu0 %1601
      %1603 = vrot.lane.b32.xlu0 %v1532, 28
      %v1604 = vpop.permute.xlu0 %1603
      %1605 = vrot.lane.b32.xlu0 %v1534, 28
      %v1606 = vpop.permute.xlu0 %1605
      %1607 = vrot.lane.b32.xlu0 %v1536, 28
      %v1608 = vpop.permute.xlu0 %1607
      %1609 = vrot.lane.b32.xlu0 %v1538, 28
      %v1610 = vpop.permute.xlu0 %1609
      %1611 = vrot.lane.b32.xlu0 %v1540, 28
      %v1612 = vpop.permute.xlu0 %1611
      %1613 = vrot.lane.b32.xlu0 %v1542, 28
      %v1614 = vpop.permute.xlu0 %1613
      %1615 = vrot.lane.b32.xlu0 %v1544, 28
      %v1616 = vpop.permute.xlu0 %1615
      %1617 = vrot.lane.b32.xlu0 %v1546, 28
      %v1618 = vpop.permute.xlu0 %1617
      %1619 = vrot.lane.b32.xlu0 %v1548, 28
      %v1620 = vpop.permute.xlu0 %1619
      %vm1658 = vcmask 1041408
      %v1659 = vrot.slane %v465, 6
      %v1660 = vrot.slane %v407, 6
      %v1661 = vsel %vm1658, %v1659, %v1660
      %v1662 = vrot.slane %v408, 6
      %v1663 = vsel %vm1658, %v1660, %v1662
      %v1664 = vrot.slane %v409, 6
      %v1665 = vsel %vm1658, %v1662, %v1664
      %v1666 = vrot.slane %v410, 6
      %v1667 = vsel %vm1658, %v1664, %v1666
      %v1668 = vrot.slane %v411, 6
      %v1669 = vsel %vm1658, %v1666, %v1668
      %v1670 = vrot.slane %v412, 6
      %v1671 = vsel %vm1658, %v1668, %v1670
      %v1672 = vrot.slane %v413, 6
      %v1673 = vsel %vm1658, %v1670, %v1672
      %v1674 = vrot.slane %v414, 6
      %v1675 = vsel %vm1658, %v1672, %v1674
      %v1676 = vrot.slane %v415, 6
      %v1677 = vsel %vm1658, %v1674, %v1676
      %v1678 = vrot.slane %v416, 6
      %v1679 = vsel %vm1658, %v1676, %v1678
      %v1680 = vrot.slane %v417, 6
      %v1681 = vsel %vm1658, %v1678, %v1680
      %v1682 = vrot.slane %v418, 6
      %v1683 = vsel %vm1658, %v1680, %v1682
      %v1684 = vrot.slane %v419, 6
      %v1685 = vsel %vm1658, %v1682, %v1684
      %v1686 = vrot.slane %v420, 6
      %v1687 = vsel %vm1658, %v1684, %v1686
      %v1688 = vrot.slane %v421, 6
      %v1689 = vsel %vm1658, %v1686, %v1688
      %v1690 = vrot.slane %v422, 6
      %v1691 = vsel %vm1658, %v1688, %v1690
      %v1692 = vrot.slane %v423, 6
      %v1693 = vsel %vm1658, %v1690, %v1692
      %v1694 = vrot.slane %v424, 6
      %v1695 = vsel %vm1658, %v1692, %v1694
      %v1696 = vrot.slane %v425, 6
      %v1697 = vsel %vm1658, %v1694, %v1696
      %v1698 = vrot.slane %v426, 6
      %v1699 = vsel %vm1658, %v1696, %v1698
      %v1700 = vrot.slane %v427, 6
      %v1701 = vsel %vm1658, %v1698, %v1700
      %v1702 = vrot.slane %v428, 6
      %v1703 = vsel %vm1658, %v1700, %v1702
      %v1704 = vrot.slane %v429, 6
      %v1705 = vsel %vm1658, %v1702, %v1704
      %v1706 = vrot.slane %v430, 6
      %v1707 = vsel %vm1658, %v1704, %v1706
      %v1708 = vrot.slane %v431, 6
      %v1709 = vsel %vm1658, %v1706, %v1708
      %v1710 = vrot.slane %v432, 6
      %v1711 = vsel %vm1658, %v1708, %v1710
      %v1712 = vrot.slane %v433, 6
      %v1713 = vsel %vm1658, %v1710, %v1712
      %v1714 = vrot.slane %v434, 6
      %v1715 = vsel %vm1658, %v1712, %v1714
      %v1716 = vrot.slane %v435, 6
      %v1717 = vsel %vm1658, %v1714, %v1716
      %v1718 = vrot.slane %v436, 6
      %v1719 = vsel %vm1658, %v1716, %v1718
      %v1720 = vrot.slane %v437, 6
      %v1721 = vsel %vm1658, %v1718, %v1720
      %v1722 = vrot.slane %v447, 6
      %v1723 = vsel %vm1658, %v1720, %v1722
      %v1724 = vrot.slane %v448, 6
      %v1725 = vsel %vm1658, %v1722, %v1724
      %v1726 = vrot.slane %v459, 6
      %v1727 = vsel %vm1658, %v1724, %v1726
      %v1728 = vrot.slane %v460, 6
      %v1729 = vsel %vm1658, %v1726, %v1728
      %v1730 = vrot.slane %v463, 6
      %v1731 = vsel %vm1658, %v1728, %v1730
      %1732 = vrot.lane.b32.xlu0 %v1661, 32
      %v1733 = vpop.permute.xlu0 %1732
      %1734 = vrot.lane.b32.xlu0 %v1663, 32
      %v1735 = vpop.permute.xlu0 %1734
      %1736 = vrot.lane.b32.xlu0 %v1665, 32
      %v1737 = vpop.permute.xlu0 %1736
      %1738 = vrot.lane.b32.xlu0 %v1667, 32
      %v1739 = vpop.permute.xlu0 %1738
      %1740 = vrot.lane.b32.xlu0 %v1669, 32
      %v1741 = vpop.permute.xlu0 %1740
      %1742 = vrot.lane.b32.xlu0 %v1671, 32
      %v1743 = vpop.permute.xlu0 %1742
      %1744 = vrot.lane.b32.xlu0 %v1673, 32
      %v1745 = vpop.permute.xlu0 %1744
      %1746 = vrot.lane.b32.xlu0 %v1675, 32
      %v1747 = vpop.permute.xlu0 %1746
      %1748 = vrot.lane.b32.xlu0 %v1677, 32
      %v1749 = vpop.permute.xlu0 %1748
      %1750 = vrot.lane.b32.xlu0 %v1679, 32
      %v1751 = vpop.permute.xlu0 %1750
      %1752 = vrot.lane.b32.xlu0 %v1681, 32
      %v1753 = vpop.permute.xlu0 %1752
      %1754 = vrot.lane.b32.xlu0 %v1683, 32
      %v1755 = vpop.permute.xlu0 %1754
      %1756 = vrot.lane.b32.xlu0 %v1685, 32
      %v1757 = vpop.permute.xlu0 %1756
      %1758 = vrot.lane.b32.xlu0 %v1687, 32
      %v1759 = vpop.permute.xlu0 %1758
      %1760 = vrot.lane.b32.xlu0 %v1689, 32
      %v1761 = vpop.permute.xlu0 %1760
      %1762 = vrot.lane.b32.xlu0 %v1691, 32
      %v1763 = vpop.permute.xlu0 %1762
      %1764 = vrot.lane.b32.xlu0 %v1693, 32
      %v1765 = vpop.permute.xlu0 %1764
      %1766 = vrot.lane.b32.xlu0 %v1695, 32
      %v1767 = vpop.permute.xlu0 %1766
      %1768 = vrot.lane.b32.xlu0 %v1697, 32
      %v1769 = vpop.permute.xlu0 %1768
      %1770 = vrot.lane.b32.xlu0 %v1699, 32
      %v1771 = vpop.permute.xlu0 %1770
      %1772 = vrot.lane.b32.xlu0 %v1701, 32
      %v1773 = vpop.permute.xlu0 %1772
      %1774 = vrot.lane.b32.xlu0 %v1703, 32
      %v1775 = vpop.permute.xlu0 %1774
      %1776 = vrot.lane.b32.xlu0 %v1705, 32
      %v1777 = vpop.permute.xlu0 %1776
      %1778 = vrot.lane.b32.xlu0 %v1707, 32
      %v1779 = vpop.permute.xlu0 %1778
      %1780 = vrot.lane.b32.xlu0 %v1709, 32
      %v1781 = vpop.permute.xlu0 %1780
      %1782 = vrot.lane.b32.xlu0 %v1711, 32
      %v1783 = vpop.permute.xlu0 %1782
      %1784 = vrot.lane.b32.xlu0 %v1713, 32
      %v1785 = vpop.permute.xlu0 %1784
      %1786 = vrot.lane.b32.xlu0 %v1715, 32
      %v1787 = vpop.permute.xlu0 %1786
      %1788 = vrot.lane.b32.xlu0 %v1717, 32
      %v1789 = vpop.permute.xlu0 %1788
      %1790 = vrot.lane.b32.xlu0 %v1719, 32
      %v1791 = vpop.permute.xlu0 %1790
      %1792 = vrot.lane.b32.xlu0 %v1721, 32
      %v1793 = vpop.permute.xlu0 %1792
      %1794 = vrot.lane.b32.xlu0 %v1723, 32
      %v1795 = vpop.permute.xlu0 %1794
      %1796 = vrot.lane.b32.xlu0 %v1725, 32
      %v1797 = vpop.permute.xlu0 %1796
      %1798 = vrot.lane.b32.xlu0 %v1727, 32
      %v1799 = vpop.permute.xlu0 %1798
      %1800 = vrot.lane.b32.xlu0 %v1729, 32
      %v1801 = vpop.permute.xlu0 %1800
      %1802 = vrot.lane.b32.xlu0 %v1731, 32
      %v1803 = vpop.permute.xlu0 %1802
      %vm1840 = vcmask 31744
      %v1841 = vsel %vm1840, %v402, %v578
      %v1842 = vsel %vm1840, %v403, %v580
      %v1843 = vsel %vm1840, %v404, %v582
      %v1844 = vsel %vm1840, %v405, %v584
      %v1845 = vsel %vm1840, %v406, %v586
      %v1846 = vsel %vm1840, %v407, %v588
      %v1847 = vsel %vm1840, %v408, %v590
      %v1848 = vsel %vm1840, %v409, %v592
      %v1849 = vsel %vm1840, %v410, %v594
      %v1850 = vsel %vm1840, %v411, %v596
      %v1851 = vsel %vm1840, %v412, %v598
      %v1852 = vsel %vm1840, %v413, %v600
      %v1853 = vsel %vm1840, %v414, %v602
      %v1854 = vsel %vm1840, %v415, %v604
      %v1855 = vsel %vm1840, %v416, %v606
      %v1856 = vsel %vm1840, %v417, %v608
      %v1857 = vsel %vm1840, %v418, %v610
      %v1858 = vsel %vm1840, %v419, %v612
      %v1859 = vsel %vm1840, %v420, %v614
      %v1860 = vsel %vm1840, %v421, %v616
      %v1861 = vsel %vm1840, %v422, %v618
      %v1862 = vsel %vm1840, %v423, %v620
      %v1863 = vsel %vm1840, %v424, %v622
      %v1864 = vsel %vm1840, %v425, %v624
      %v1865 = vsel %vm1840, %v426, %v626
      %v1866 = vsel %vm1840, %v427, %v628
      %v1867 = vsel %vm1840, %v428, %v630
      %v1868 = vsel %vm1840, %v429, %v632
      %v1869 = vsel %vm1840, %v430, %v634
      %v1870 = vsel %vm1840, %v431, %v636
      %v1871 = vsel %vm1840, %v432, %v638
      %v1872 = vsel %vm1840, %v433, %v640
      %v1873 = vsel %vm1840, %v434, %v642
      %v1874 = vsel %vm1840, %v435, %v644
      %v1875 = vsel %vm1840, %v436, %v646
      %v1876 = vsel %vm1840, %v437, %v648
      %vm1877 = vcmask 64512
      %v1878 = vsel %vm1877, %v1841, %v761
      %v1879 = vsel %vm1877, %v1842, %v763
      %v1880 = vsel %vm1877, %v1843, %v765
      %v1881 = vsel %vm1877, %v1844, %v767
      %v1882 = vsel %vm1877, %v1845, %v769
      %v1883 = vsel %vm1877, %v1846, %v771
      %v1884 = vsel %vm1877, %v1847, %v773
      %v1885 = vsel %vm1877, %v1848, %v775
      %v1886 = vsel %vm1877, %v1849, %v777
      %v1887 = vsel %vm1877, %v1850, %v779
      %v1888 = vsel %vm1877, %v1851, %v781
      %v1889 = vsel %vm1877, %v1852, %v783
      %v1890 = vsel %vm1877, %v1853, %v785
      %v1891 = vsel %vm1877, %v1854, %v787
      %v1892 = vsel %vm1877, %v1855, %v789
      %v1893 = vsel %vm1877, %v1856, %v791
      %v1894 = vsel %vm1877, %v1857, %v793
      %v1895 = vsel %vm1877, %v1858, %v795
      %v1896 = vsel %vm1877, %v1859, %v797
      %v1897 = vsel %vm1877, %v1860, %v799
      %v1898 = vsel %vm1877, %v1861, %v801
      %v1899 = vsel %vm1877, %v1862, %v803
      %v1900 = vsel %vm1877, %v1863, %v805
      %v1901 = vsel %vm1877, %v1864, %v807
      %v1902 = vsel %vm1877, %v1865, %v809
      %v1903 = vsel %vm1877, %v1866, %v811
      %v1904 = vsel %vm1877, %v1867, %v813
      %v1905 = vsel %vm1877, %v1868, %v815
      %v1906 = vsel %vm1877, %v1869, %v817
      %v1907 = vsel %vm1877, %v1870, %v819
      %v1908 = vsel %vm1877, %v1871, %v821
      %v1909 = vsel %vm1877, %v1872, %v823
      %v1910 = vsel %vm1877, %v1873, %v825
      %v1911 = vsel %vm1877, %v1874, %v827
      %v1912 = vsel %vm1877, %v1875, %v829
      %v1913 = vsel %vm1877, %v1876, %v831
      %vm1914 = vcmask 97280
      %v1915 = vsel %vm1914, %v1878, %v881
      %v1916 = vsel %vm1914, %v1879, %v883
      %v1917 = vsel %vm1914, %v1880, %v885
      %v1918 = vsel %vm1914, %v1881, %v887
      %v1919 = vsel %vm1914, %v1882, %v889
      %v1920 = vsel %vm1914, %v1883, %v891
      %v1921 = vsel %vm1914, %v1884, %v893
      %v1922 = vsel %vm1914, %v1885, %v895
      %v1923 = vsel %vm1914, %v1886, %v897
      %v1924 = vsel %vm1914, %v1887, %v899
      %v1925 = vsel %vm1914, %v1888, %v901
      %v1926 = vsel %vm1914, %v1889, %v903
      %v1927 = vsel %vm1914, %v1890, %v905
      %v1928 = vsel %vm1914, %v1891, %v907
      %v1929 = vsel %vm1914, %v1892, %v909
      %v1930 = vsel %vm1914, %v1893, %v911
      %v1931 = vsel %vm1914, %v1894, %v913
      %v1932 = vsel %vm1914, %v1895, %v915
      %v1933 = vsel %vm1914, %v1896, %v917
      %v1934 = vsel %vm1914, %v1897, %v919
      %v1935 = vsel %vm1914, %v1898, %v921
      %v1936 = vsel %vm1914, %v1899, %v923
      %v1937 = vsel %vm1914, %v1900, %v925
      %v1938 = vsel %vm1914, %v1901, %v927
      %v1939 = vsel %vm1914, %v1902, %v929
      %v1940 = vsel %vm1914, %v1903, %v931
      %v1941 = vsel %vm1914, %v1904, %v933
      %v1942 = vsel %vm1914, %v1905, %v935
      %v1943 = vsel %vm1914, %v1906, %v937
      %v1944 = vsel %vm1914, %v1907, %v939
      %v1945 = vsel %vm1914, %v1908, %v941
      %v1946 = vsel %vm1914, %v1909, %v943
      %v1947 = vsel %vm1914, %v1910, %v945
      %v1948 = vsel %vm1914, %v1911, %v947
      %v1949 = vsel %vm1914, %v1912, %v949
      %v1950 = vsel %vm1914, %v1913, %v951
      %vm1951 = vcmask 130048
      %v1952 = vsel %vm1951, %v1915, %v1064
      %v1953 = vsel %vm1951, %v1916, %v1066
      %v1954 = vsel %vm1951, %v1917, %v1068
      %v1955 = vsel %vm1951, %v1918, %v1070
      %v1956 = vsel %vm1951, %v1919, %v1072
      %v1957 = vsel %vm1951, %v1920, %v1074
      %v1958 = vsel %vm1951, %v1921, %v1076
      %v1959 = vsel %vm1951, %v1922, %v1078
      %v1960 = vsel %vm1951, %v1923, %v1080
      %v1961 = vsel %vm1951, %v1924, %v1082
      %v1962 = vsel %vm1951, %v1925, %v1084
      %v1963 = vsel %vm1951, %v1926, %v1086
      %v1964 = vsel %vm1951, %v1927, %v1088
      %v1965 = vsel %vm1951, %v1928, %v1090
      %v1966 = vsel %vm1951, %v1929, %v1092
      %v1967 = vsel %vm1951, %v1930, %v1094
      %v1968 = vsel %vm1951, %v1931, %v1096
      %v1969 = vsel %vm1951, %v1932, %v1098
      %v1970 = vsel %vm1951, %v1933, %v1100
      %v1971 = vsel %vm1951, %v1934, %v1102
      %v1972 = vsel %vm1951, %v1935, %v1104
      %v1973 = vsel %vm1951, %v1936, %v1106
      %v1974 = vsel %vm1951, %v1937, %v1108
      %v1975 = vsel %vm1951, %v1938, %v1110
      %v1976 = vsel %vm1951, %v1939, %v1112
      %v1977 = vsel %vm1951, %v1940, %v1114
      %v1978 = vsel %vm1951, %v1941, %v1116
      %v1979 = vsel %vm1951, %v1942, %v1118
      %v1980 = vsel %vm1951, %v1943, %v1120
      %v1981 = vsel %vm1951, %v1944, %v1122
      %v1982 = vsel %vm1951, %v1945, %v1124
      %v1983 = vsel %vm1951, %v1946, %v1126
      %v1984 = vsel %vm1951, %v1947, %v1128
      %v1985 = vsel %vm1951, %v1948, %v1130
      %v1986 = vsel %vm1951, %v1949, %v1132
      %v1987 = vsel %vm1951, %v1950, %v1134
      %vm1988 = vcmask 162816
      %v1989 = vsel %vm1988, %v1952, %v1247
      %v1990 = vsel %vm1988, %v1953, %v1249
      %v1991 = vsel %vm1988, %v1954, %v1251
      %v1992 = vsel %vm1988, %v1955, %v1253
      %v1993 = vsel %vm1988, %v1956, %v1255
      %v1994 = vsel %vm1988, %v1957, %v1257
      %v1995 = vsel %vm1988, %v1958, %v1259
      %v1996 = vsel %vm1988, %v1959, %v1261
      %v1997 = vsel %vm1988, %v1960, %v1263
      %v1998 = vsel %vm1988, %v1961, %v1265
      %v1999 = vsel %vm1988, %v1962, %v1267
      %v2000 = vsel %vm1988, %v1963, %v1269
      %v2001 = vsel %vm1988, %v1964, %v1271
      %v2002 = vsel %vm1988, %v1965, %v1273
      %v2003 = vsel %vm1988, %v1966, %v1275
      %v2004 = vsel %vm1988, %v1967, %v1277
      %v2005 = vsel %vm1988, %v1968, %v1279
      %v2006 = vsel %vm1988, %v1969, %v1281
      %v2007 = vsel %vm1988, %v1970, %v1283
      %v2008 = vsel %vm1988, %v1971, %v1285
      %v2009 = vsel %vm1988, %v1972, %v1287
      %v2010 = vsel %vm1988, %v1973, %v1289
      %v2011 = vsel %vm1988, %v1974, %v1291
      %v2012 = vsel %vm1988, %v1975, %v1293
      %v2013 = vsel %vm1988, %v1976, %v1295
      %v2014 = vsel %vm1988, %v1977, %v1297
      %v2015 = vsel %vm1988, %v1978, %v1299
      %v2016 = vsel %vm1988, %v1979, %v1301
      %v2017 = vsel %vm1988, %v1980, %v1303
      %v2018 = vsel %vm1988, %v1981, %v1305
      %v2019 = vsel %vm1988, %v1982, %v1307
      %v2020 = vsel %vm1988, %v1983, %v1309
      %v2021 = vsel %vm1988, %v1984, %v1311
      %v2022 = vsel %vm1988, %v1985, %v1313
      %v2023 = vsel %vm1988, %v1986, %v1315
      %v2024 = vsel %vm1988, %v1987, %v1317
      %vm2025 = vcmask 195584
      %v2026 = vsel %vm2025, %v1989, %v1367
      %v2027 = vsel %vm2025, %v1990, %v1369
      %v2028 = vsel %vm2025, %v1991, %v1371
      %v2029 = vsel %vm2025, %v1992, %v1373
      %v2030 = vsel %vm2025, %v1993, %v1375
      %v2031 = vsel %vm2025, %v1994, %v1377
      %v2032 = vsel %vm2025, %v1995, %v1379
      %v2033 = vsel %vm2025, %v1996, %v1381
      %v2034 = vsel %vm2025, %v1997, %v1383
      %v2035 = vsel %vm2025, %v1998, %v1385
      %v2036 = vsel %vm2025, %v1999, %v1387
      %v2037 = vsel %vm2025, %v2000, %v1389
      %v2038 = vsel %vm2025, %v2001, %v1391
      %v2039 = vsel %vm2025, %v2002, %v1393
      %v2040 = vsel %vm2025, %v2003, %v1395
      %v2041 = vsel %vm2025, %v2004, %v1397
      %v2042 = vsel %vm2025, %v2005, %v1399
      %v2043 = vsel %vm2025, %v2006, %v1401
      %v2044 = vsel %vm2025, %v2007, %v1403
      %v2045 = vsel %vm2025, %v2008, %v1405
      %v2046 = vsel %vm2025, %v2009, %v1407
      %v2047 = vsel %vm2025, %v2010, %v1409
      %v2048 = vsel %vm2025, %v2011, %v1411
      %v2049 = vsel %vm2025, %v2012, %v1413
      %v2050 = vsel %vm2025, %v2013, %v1415
      %v2051 = vsel %vm2025, %v2014, %v1417
      %v2052 = vsel %vm2025, %v2015, %v1419
      %v2053 = vsel %vm2025, %v2016, %v1421
      %v2054 = vsel %vm2025, %v2017, %v1423
      %v2055 = vsel %vm2025, %v2018, %v1425
      %v2056 = vsel %vm2025, %v2019, %v1427
      %v2057 = vsel %vm2025, %v2020, %v1429
      %v2058 = vsel %vm2025, %v2021, %v1431
      %v2059 = vsel %vm2025, %v2022, %v1433
      %v2060 = vsel %vm2025, %v2023, %v1435
      %v2061 = vsel %vm2025, %v2024, %v1437
      %vm2062 = vcmask 228352
      %v2063 = vsel %vm2062, %v2026, %v1550
      %v2064 = vsel %vm2062, %v2027, %v1552
      %v2065 = vsel %vm2062, %v2028, %v1554
      %v2066 = vsel %vm2062, %v2029, %v1556
      %v2067 = vsel %vm2062, %v2030, %v1558
      %v2068 = vsel %vm2062, %v2031, %v1560
      %v2069 = vsel %vm2062, %v2032, %v1562
      %v2070 = vsel %vm2062, %v2033, %v1564
      %v2071 = vsel %vm2062, %v2034, %v1566
      %v2072 = vsel %vm2062, %v2035, %v1568
      %v2073 = vsel %vm2062, %v2036, %v1570
      %v2074 = vsel %vm2062, %v2037, %v1572
      %v2075 = vsel %vm2062, %v2038, %v1574
      %v2076 = vsel %vm2062, %v2039, %v1576
      %v2077 = vsel %vm2062, %v2040, %v1578
      %v2078 = vsel %vm2062, %v2041, %v1580
      %v2079 = vsel %vm2062, %v2042, %v1582
      %v2080 = vsel %vm2062, %v2043, %v1584
      %v2081 = vsel %vm2062, %v2044, %v1586
      %v2082 = vsel %vm2062, %v2045, %v1588
      %v2083 = vsel %vm2062, %v2046, %v1590
      %v2084 = vsel %vm2062, %v2047, %v1592
      %v2085 = vsel %vm2062, %v2048, %v1594
      %v2086 = vsel %vm2062, %v2049, %v1596
      %v2087 = vsel %vm2062, %v2050, %v1598
      %v2088 = vsel %vm2062, %v2051, %v1600
      %v2089 = vsel %vm2062, %v2052, %v1602
      %v2090 = vsel %vm2062, %v2053, %v1604
      %v2091 = vsel %vm2062, %v2054, %v1606
      %v2092 = vsel %vm2062, %v2055, %v1608
      %v2093 = vsel %vm2062, %v2056, %v1610
      %v2094 = vsel %vm2062, %v2057, %v1612
      %v2095 = vsel %vm2062, %v2058, %v1614
      %v2096 = vsel %vm2062, %v2059, %v1616
      %v2097 = vsel %vm2062, %v2060, %v1618
      %v2098 = vsel %vm2062, %v2061, %v1620
      %vm2099 = vcmask 261120
      %v2100 = vsel %vm2099, %v2063, %v1733
      %v2101 = vsel %vm2099, %v2064, %v1735
      %v2102 = vsel %vm2099, %v2065, %v1737
      %v2103 = vsel %vm2099, %v2066, %v1739
      %v2104 = vsel %vm2099, %v2067, %v1741
      %v2105 = vsel %vm2099, %v2068, %v1743
      %v2106 = vsel %vm2099, %v2069, %v1745
      %v2107 = vsel %vm2099, %v2070, %v1747
      %v2108 = vsel %vm2099, %v2071, %v1749
      %v2109 = vsel %vm2099, %v2072, %v1751
      %v2110 = vsel %vm2099, %v2073, %v1753
      %v2111 = vsel %vm2099, %v2074, %v1755
      %v2112 = vsel %vm2099, %v2075, %v1757
      %v2113 = vsel %vm2099, %v2076, %v1759
      %v2114 = vsel %vm2099, %v2077, %v1761
      %v2115 = vsel %vm2099, %v2078, %v1763
      %v2116 = vsel %vm2099, %v2079, %v1765
      %v2117 = vsel %vm2099, %v2080, %v1767
      %v2118 = vsel %vm2099, %v2081, %v1769
      %v2119 = vsel %vm2099, %v2082, %v1771
      %v2120 = vsel %vm2099, %v2083, %v1773
      %v2121 = vsel %vm2099, %v2084, %v1775
      %v2122 = vsel %vm2099, %v2085, %v1777
      %v2123 = vsel %vm2099, %v2086, %v1779
      %v2124 = vsel %vm2099, %v2087, %v1781
      %v2125 = vsel %vm2099, %v2088, %v1783
      %v2126 = vsel %vm2099, %v2089, %v1785
      %v2127 = vsel %vm2099, %v2090, %v1787
      %v2128 = vsel %vm2099, %v2091, %v1789
      %v2129 = vsel %vm2099, %v2092, %v1791
      %v2130 = vsel %vm2099, %v2093, %v1793
      %v2131 = vsel %vm2099, %v2094, %v1795
      %v2132 = vsel %vm2099, %v2095, %v1797
      %v2133 = vsel %vm2099, %v2096, %v1799
      %v2134 = vsel %vm2099, %v2097, %v1801
      %v2135 = vsel %vm2099, %v2098, %v1803
      %v2136 = vpack.c.bf16 %v2101, %v2100
      %v2137 = vpack.c.bf16 %v2103, %v2102
      %v2138 = vpack.c.bf16 %v2105, %v2104
      %v2139 = vpack.c.bf16 %v2107, %v2106
      %v2140 = vpack.c.bf16 %v2109, %v2108
      %v2141 = vpack.c.bf16 %v2111, %v2110
      %v2142 = vpack.c.bf16 %v2113, %v2112
      %v2143 = vpack.c.bf16 %v2115, %v2114
      %v2144 = vpack.c.bf16 %v2117, %v2116
      %v2145 = vpack.c.bf16 %v2119, %v2118
      %v2146 = vpack.c.bf16 %v2121, %v2120
      %v2147 = vpack.c.bf16 %v2123, %v2122
      %v2148 = vpack.c.bf16 %v2125, %v2124
      %v2149 = vpack.c.bf16 %v2127, %v2126
      %v2150 = vpack.c.bf16 %v2129, %v2128
      %v2151 = vpack.c.bf16 %v2131, %v2130
      %v2152 = vpack.c.bf16 %v2133, %v2132
      %v2153 = vpack.c.bf16 %v2135, %v2134
      %v2154 = vld [vmem:[%s2] sm:$0xf]
      %v2155 = vld [vmem:[%s2 + $0x4] sm:$0xf]
      %v2156 = vld [vmem:[%s2 + $0x8] sm:$0xf]
      %v2157 = vld [vmem:[%s2 + $0xc] sm:$0xf]
      %v2158 = vld [vmem:[%s2 + $0x10] sm:$0x3]
      %v2164 = vunpack.c.l.b16 %v2154
      %v2165 = vunpack.c.l.b16 %v2155
      %v2166 = vunpack.c.l.b16 %v2156
      %v2167 = vunpack.c.l.b16 %v2157
      %v2168 = vunpack.c.l.b16 %v2158
      %v2169 = vpack.c.b16 %v2165, %v2164
      %v2170 = vpack.c.b16 %v2167, %v2166
      %v2171 = vpack.c.b16 %v2168, %v2168
      %vm2174 = vcmask 293888
      %v2176 = vsel %vm2174, %v2136, 0
      %v2179 = vsel %vm2174, %v2137, 0
      %v2182 = vsel %vm2174, %v2138, 0
      %v2185 = vsel %vm2174, %v2139, 0
      %v2188 = vsel %vm2174, %v2140, 0
      %v2191 = vsel %vm2174, %v2141, 0
      %v2194 = vsel %vm2174, %v2142, 0
      %v2197 = vsel %vm2174, %v2143, 0
      %v2200 = vsel %vm2174, %v2144, 0
      %v2203 = vsel %vm2174, %v2145, 0
      %v2206 = vsel %vm2174, %v2146, 0
      %v2209 = vsel %vm2174, %v2147, 0
      %v2212 = vsel %vm2174, %v2148, 0
      %v2215 = vsel %vm2174, %v2149, 0
      %v2218 = vsel %vm2174, %v2150, 0
      %v2221 = vsel %vm2174, %v2151, 0
      %v2224 = vsel %vm2174, %v2152, 0
      %v2227 = vsel %vm2174, %v2153, 0
      %v2230 = vsel %vm1658, %v2171, 0
      %2232 = vmatprep.subr.bf16.mxu0 0
      %2233 = vmatpush1.bf16.msra.mxu0 0
      %2234 = vmatprep.subr.bf16.mxu0 0
      %2235 = vmatpush1.bf16.msra.mxu0 0
      %2236 = vmatprep.subr.bf16.mxu0 0
      %2237 = vmatpush1.bf16.msra.mxu0 0
      %2238 = vmatprep.subr.bf16.mxu0 0
      %2239 = vmatpush1.bf16.msra.mxu0 0
      %2240 = vmatprep.subr.bf16.mxu0 0
      %2241 = vmatpush1.bf16.msra.mxu0 0
      %2242 = vmatprep.subr.bf16.mxu0 0
      %2243 = vmatpush1.bf16.msra.mxu0 %v2230
      %2244 = vmatprep.subr.bf16.mxu0 0
      %2245 = vmatpush1.bf16.msra.mxu0 %v2170
      %2246 = vmatprep.subr.bf16.mxu0 0
      %2247 = vmatpush1.bf16.msra.mxu0 %v2169
      %2248 = vmatprep.subr.bf16.mxu0 0
      %2249 = vmatpush2.bf16.msra.mxu0 0
      %2250 = vmatprep.subr.bf16.mxu0 0
      %2251 = vmatpush2.bf16.msra.mxu0 0
      %2252 = vmatprep.subr.bf16.mxu0 0
      %2253 = vmatpush2.bf16.msra.mxu0 0
      %2254 = vmatprep.subr.bf16.mxu0 0
      %2255 = vmatpush2.bf16.msra.mxu0 0
      %2256 = vmatprep.subr.bf16.mxu0 0
      %2257 = vmatpush2.bf16.msra.mxu0 0
      %2258 = vmatprep.subr.bf16.mxu0 0
      %2259 = vmatpush2.bf16.msra.mxu0 0
      %2260 = vmatprep.subr.bf16.mxu0 0
      %2261 = vmatpush2.bf16.msra.mxu0 0
      %2262 = vmatprep.subr.bf16.mxu0 0
      %2263 = vmatpush2.bf16.msra.mxu0 0
      %2264 = vmatprep.mubr.bf16.mxu0 0
      %2265 = vmatmul.mubr.bf16.gmra.mxu0 %v2176
      %v2266 = vpop.f32.mrf.mxu0
      %v2267 = vadd.f32 0.0, %v2266
      %v2268 = vpop.f32.mrf.mxu0
      %v2269 = vpop.f32.mrf.mxu0
      %v2270 = vadd.f32 0.0, %v2269
      %v2271 = vpop.f32.mrf.mxu0
      %2272 = vmatprep.mubr.bf16.mxu0 0
      %2273 = vmatmul.mubr.bf16.gmra.mxu0 %v2179
      %v2274 = vpop.f32.mrf.mxu0
      %v2275 = vadd.f32 0.0, %v2274
      %v2276 = vpop.f32.mrf.mxu0
      %v2277 = vpop.f32.mrf.mxu0
      %v2278 = vadd.f32 0.0, %v2277
      %v2279 = vpop.f32.mrf.mxu0
      %2280 = vmatprep.mubr.bf16.mxu0 0
      %2281 = vmatmul.mubr.bf16.gmra.mxu0 %v2182
      %v2282 = vpop.f32.mrf.mxu0
      %v2283 = vadd.f32 0.0, %v2282
      %v2284 = vpop.f32.mrf.mxu0
      %v2285 = vpop.f32.mrf.mxu0
      %v2286 = vadd.f32 0.0, %v2285
      %v2287 = vpop.f32.mrf.mxu0
      %2288 = vmatprep.mubr.bf16.mxu0 0
      %2289 = vmatmul.mubr.bf16.gmra.mxu0 %v2185
      %v2290 = vpop.f32.mrf.mxu0
      %v2291 = vadd.f32 0.0, %v2290
      %v2292 = vpop.f32.mrf.mxu0
      %v2293 = vpop.f32.mrf.mxu0
      %v2294 = vadd.f32 0.0, %v2293
      %v2295 = vpop.f32.mrf.mxu0
      %2296 = vmatprep.mubr.bf16.mxu0 0
      %2297 = vmatmul.mubr.bf16.gmra.mxu0 %v2188
      %v2298 = vpop.f32.mrf.mxu0
      %v2299 = vadd.f32 0.0, %v2298
      %v2300 = vpop.f32.mrf.mxu0
      %v2301 = vpop.f32.mrf.mxu0
      %v2302 = vadd.f32 0.0, %v2301
      %v2303 = vpop.f32.mrf.mxu0
      %2304 = vmatprep.mubr.bf16.mxu0 0
      %2305 = vmatmul.mubr.bf16.gmra.mxu0 %v2191
      %v2306 = vpop.f32.mrf.mxu0
      %v2307 = vadd.f32 0.0, %v2306
      %v2308 = vpop.f32.mrf.mxu0
      %v2309 = vpop.f32.mrf.mxu0
      %v2310 = vadd.f32 0.0, %v2309
      %v2311 = vpop.f32.mrf.mxu0
      %2312 = vmatprep.mubr.bf16.mxu0 0
      %2313 = vmatmul.mubr.bf16.gmra.mxu0 %v2194
      %v2314 = vpop.f32.mrf.mxu0
      %v2315 = vadd.f32 0.0, %v2314
      %v2316 = vpop.f32.mrf.mxu0
      %v2317 = vpop.f32.mrf.mxu0
      %v2318 = vadd.f32 0.0, %v2317
      %v2319 = vpop.f32.mrf.mxu0
      %2320 = vmatprep.mubr.bf16.mxu0 0
      %2321 = vmatmul.mubr.bf16.gmra.mxu0 %v2197
      %v2322 = vpop.f32.mrf.mxu0
      %v2323 = vadd.f32 0.0, %v2322
      %v2324 = vpop.f32.mrf.mxu0
      %v2325 = vpop.f32.mrf.mxu0
      %v2326 = vadd.f32 0.0, %v2325
      %v2327 = vpop.f32.mrf.mxu0
      %2328 = vmatprep.mubr.bf16.mxu0 0
      %2329 = vmatmul.mubr.bf16.gmra.mxu0 %v2200
      %v2330 = vpop.f32.mrf.mxu0
      %v2331 = vadd.f32 0.0, %v2330
      %v2332 = vpop.f32.mrf.mxu0
      %v2333 = vpop.f32.mrf.mxu0
      %v2334 = vadd.f32 0.0, %v2333
      %v2335 = vpop.f32.mrf.mxu0
      %2336 = vmatprep.mubr.bf16.mxu0 0
      %2337 = vmatmul.mubr.bf16.gmra.mxu0 %v2203
      %v2338 = vpop.f32.mrf.mxu0
      %v2339 = vadd.f32 0.0, %v2338
      %v2340 = vpop.f32.mrf.mxu0
      %v2341 = vpop.f32.mrf.mxu0
      %v2342 = vadd.f32 0.0, %v2341
      %v2343 = vpop.f32.mrf.mxu0
      %2344 = vmatprep.mubr.bf16.mxu0 0
      %2345 = vmatmul.mubr.bf16.gmra.mxu0 %v2206
      %v2346 = vpop.f32.mrf.mxu0
      %v2347 = vadd.f32 0.0, %v2346
      %v2348 = vpop.f32.mrf.mxu0
      %v2349 = vpop.f32.mrf.mxu0
      %v2350 = vadd.f32 0.0, %v2349
      %v2351 = vpop.f32.mrf.mxu0
      %2352 = vmatprep.mubr.bf16.mxu0 0
      %2353 = vmatmul.mubr.bf16.gmra.mxu0 %v2209
      %v2354 = vpop.f32.mrf.mxu0
      %v2355 = vadd.f32 0.0, %v2354
      %v2356 = vpop.f32.mrf.mxu0
      %v2357 = vpop.f32.mrf.mxu0
      %v2358 = vadd.f32 0.0, %v2357
      %v2359 = vpop.f32.mrf.mxu0
      %2360 = vmatprep.mubr.bf16.mxu0 0
      %2361 = vmatmul.mubr.bf16.gmra.mxu0 %v2212
      %v2362 = vpop.f32.mrf.mxu0
      %v2363 = vadd.f32 0.0, %v2362
      %v2364 = vpop.f32.mrf.mxu0
      %v2365 = vpop.f32.mrf.mxu0
      %v2366 = vadd.f32 0.0, %v2365
      %v2367 = vpop.f32.mrf.mxu0
      %2368 = vmatprep.mubr.bf16.mxu0 0
      %2369 = vmatmul.mubr.bf16.gmra.mxu0 %v2215
      %v2370 = vpop.f32.mrf.mxu0
      %v2371 = vadd.f32 0.0, %v2370
      %v2372 = vpop.f32.mrf.mxu0
      %v2373 = vpop.f32.mrf.mxu0
      %v2374 = vadd.f32 0.0, %v2373
      %v2375 = vpop.f32.mrf.mxu0
      %2376 = vmatprep.mubr.bf16.mxu0 0
      %2377 = vmatmul.mubr.bf16.gmra.mxu0 %v2218
      %v2378 = vpop.f32.mrf.mxu0
      %v2379 = vadd.f32 0.0, %v2378
      %v2380 = vpop.f32.mrf.mxu0
      %v2381 = vpop.f32.mrf.mxu0
      %v2382 = vadd.f32 0.0, %v2381
      %v2383 = vpop.f32.mrf.mxu0
      %2384 = vmatprep.mubr.bf16.mxu0 0
      %2385 = vmatmul.mubr.bf16.gmra.mxu0 %v2221
      %v2386 = vpop.f32.mrf.mxu0
      %v2387 = vadd.f32 0.0, %v2386
      %v2388 = vpop.f32.mrf.mxu0
      %v2389 = vpop.f32.mrf.mxu0
      %v2390 = vadd.f32 0.0, %v2389
      %v2391 = vpop.f32.mrf.mxu0
      %2392 = vmatprep.mubr.bf16.mxu0 0
      %2393 = vmatmul.mubr.bf16.gmra.mxu0 %v2224
      %v2394 = vpop.f32.mrf.mxu0
      %v2395 = vadd.f32 0.0, %v2394
      %v2396 = vpop.f32.mrf.mxu0
      %v2397 = vpop.f32.mrf.mxu0
      %v2398 = vadd.f32 0.0, %v2397
      %v2399 = vpop.f32.mrf.mxu0
      %2400 = vmatprep.mubr.bf16.mxu0 0
      %2401 = vmatmul.mubr.bf16.gmra.mxu0 %v2227
      %v2402 = vpop.f32.mrf.mxu0
      %v2403 = vadd.f32 0.0, %v2402
      %v2404 = vpop.f32.mrf.mxu0
      %v2405 = vpop.f32.mrf.mxu0
      %v2406 = vadd.f32 0.0, %v2405
      %v2407 = vpop.f32.mrf.mxu0
      %2408 = vdwg.mxu0
      %vm2409 = vcmp.gt.f32.partialorder %v2267, 0.0
      %vm2410 = vcmp.gt.f32.partialorder %v2270, 0.0
      %vm2411 = vcmp.gt.f32.partialorder %v2275, 0.0
      %vm2412 = vcmp.gt.f32.partialorder %v2278, 0.0
      %vm2413 = vcmp.gt.f32.partialorder %v2283, 0.0
      %vm2414 = vcmp.gt.f32.partialorder %v2286, 0.0
      %vm2415 = vcmp.gt.f32.partialorder %v2291, 0.0
      %vm2416 = vcmp.gt.f32.partialorder %v2294, 0.0
      %vm2417 = vcmp.gt.f32.partialorder %v2299, 0.0
      %vm2418 = vcmp.gt.f32.partialorder %v2302, 0.0
      %vm2419 = vcmp.gt.f32.partialorder %v2307, 0.0
      %vm2420 = vcmp.gt.f32.partialorder %v2310, 0.0
      %vm2421 = vcmp.gt.f32.partialorder %v2315, 0.0
      %vm2422 = vcmp.gt.f32.partialorder %v2318, 0.0
      %vm2423 = vcmp.gt.f32.partialorder %v2323, 0.0
      %vm2424 = vcmp.gt.f32.partialorder %v2326, 0.0
      %vm2425 = vcmp.gt.f32.partialorder %v2331, 0.0
      %vm2426 = vcmp.gt.f32.partialorder %v2334, 0.0
      %vm2427 = vcmp.gt.f32.partialorder %v2339, 0.0
      %vm2428 = vcmp.gt.f32.partialorder %v2342, 0.0
      %vm2429 = vcmp.gt.f32.partialorder %v2347, 0.0
      %vm2430 = vcmp.gt.f32.partialorder %v2350, 0.0
      %vm2431 = vcmp.gt.f32.partialorder %v2355, 0.0
      %vm2432 = vcmp.gt.f32.partialorder %v2358, 0.0
      %vm2433 = vcmp.gt.f32.partialorder %v2363, 0.0
      %vm2434 = vcmp.gt.f32.partialorder %v2366, 0.0
      %vm2435 = vcmp.gt.f32.partialorder %v2371, 0.0
      %vm2436 = vcmp.gt.f32.partialorder %v2374, 0.0
      %vm2437 = vcmp.gt.f32.partialorder %v2379, 0.0
      %vm2438 = vcmp.gt.f32.partialorder %v2382, 0.0
      %vm2439 = vcmp.gt.f32.partialorder %v2387, 0.0
      %vm2440 = vcmp.gt.f32.partialorder %v2390, 0.0
      %vm2441 = vcmp.gt.f32.partialorder %v2395, 0.0
      %vm2442 = vcmp.gt.f32.partialorder %v2398, 0.0
      %vm2443 = vcmp.gt.f32.partialorder %v2403, 0.0
      %vm2444 = vcmp.gt.f32.partialorder %v2406, 0.0
      %v2445 = vmul.f32 %v2267, 0.2
      %v2446 = vmul.f32 %v2270, 0.2
      %v2447 = vmul.f32 %v2275, 0.2
      %v2448 = vmul.f32 %v2278, 0.2
      %v2449 = vmul.f32 %v2283, 0.2
      %v2450 = vmul.f32 %v2286, 0.2
      %v2451 = vmul.f32 %v2291, 0.2
      %v2452 = vmul.f32 %v2294, 0.2
      %v2453 = vmul.f32 %v2299, 0.2
      %v2454 = vmul.f32 %v2302, 0.2
      %v2455 = vmul.f32 %v2307, 0.2
      %v2456 = vmul.f32 %v2310, 0.2
      %v2457 = vmul.f32 %v2315, 0.2
      %v2458 = vmul.f32 %v2318, 0.2
      %v2459 = vmul.f32 %v2323, 0.2
      %v2460 = vmul.f32 %v2326, 0.2
      %v2461 = vmul.f32 %v2331, 0.2
      %v2462 = vmul.f32 %v2334, 0.2
      %v2463 = vmul.f32 %v2339, 0.2
      %v2464 = vmul.f32 %v2342, 0.2
      %v2465 = vmul.f32 %v2347, 0.2
      %v2466 = vmul.f32 %v2350, 0.2
      %v2467 = vmul.f32 %v2355, 0.2
      %v2468 = vmul.f32 %v2358, 0.2
      %v2469 = vmul.f32 %v2363, 0.2
      %v2470 = vmul.f32 %v2366, 0.2
      %v2471 = vmul.f32 %v2371, 0.2
      %v2472 = vmul.f32 %v2374, 0.2
      %v2473 = vmul.f32 %v2379, 0.2
      %v2474 = vmul.f32 %v2382, 0.2
      %v2475 = vmul.f32 %v2387, 0.2
      %v2476 = vmul.f32 %v2390, 0.2
      %v2477 = vmul.f32 %v2395, 0.2
      %v2478 = vmul.f32 %v2398, 0.2
      %v2479 = vmul.f32 %v2403, 0.2
      %v2480 = vmul.f32 %v2406, 0.2
      %v2481 = vsel %vm2409, %v2267, %v2445
      %v2482 = vsel %vm2410, %v2270, %v2446
      %v2483 = vsel %vm2411, %v2275, %v2447
      %v2484 = vsel %vm2412, %v2278, %v2448
      %v2485 = vsel %vm2413, %v2283, %v2449
      %v2486 = vsel %vm2414, %v2286, %v2450
      %v2487 = vsel %vm2415, %v2291, %v2451
      %v2488 = vsel %vm2416, %v2294, %v2452
      %v2489 = vsel %vm2417, %v2299, %v2453
      %v2490 = vsel %vm2418, %v2302, %v2454
      %v2491 = vsel %vm2419, %v2307, %v2455
      %v2492 = vsel %vm2420, %v2310, %v2456
      %v2493 = vsel %vm2421, %v2315, %v2457
      %v2494 = vsel %vm2422, %v2318, %v2458
      %v2495 = vsel %vm2423, %v2323, %v2459
      %v2496 = vsel %vm2424, %v2326, %v2460
      %v2497 = vsel %vm2425, %v2331, %v2461
      %v2498 = vsel %vm2426, %v2334, %v2462
      %v2499 = vsel %vm2427, %v2339, %v2463
      %v2500 = vsel %vm2428, %v2342, %v2464
      %v2501 = vsel %vm2429, %v2347, %v2465
      %v2502 = vsel %vm2430, %v2350, %v2466
      %v2503 = vsel %vm2431, %v2355, %v2467
      %v2504 = vsel %vm2432, %v2358, %v2468
      %v2505 = vsel %vm2433, %v2363, %v2469
      %v2506 = vsel %vm2434, %v2366, %v2470
      %v2507 = vsel %vm2435, %v2371, %v2471
      %v2508 = vsel %vm2436, %v2374, %v2472
      %v2509 = vsel %vm2437, %v2379, %v2473
      %v2510 = vsel %vm2438, %v2382, %v2474
      %v2511 = vsel %vm2439, %v2387, %v2475
      %v2512 = vsel %vm2440, %v2390, %v2476
      %v2513 = vsel %vm2441, %v2395, %v2477
      %v2514 = vsel %vm2442, %v2398, %v2478
      %v2515 = vsel %vm2443, %v2403, %v2479
      %v2516 = vsel %vm2444, %v2406, %v2480
      %v2517 = vpack.c.bf16 %v2482, %v2481
      %v2518 = vpack.c.bf16 %v2484, %v2483
      %v2519 = vpack.c.bf16 %v2486, %v2485
      %v2520 = vpack.c.bf16 %v2488, %v2487
      %v2521 = vpack.c.bf16 %v2490, %v2489
      %v2522 = vpack.c.bf16 %v2492, %v2491
      %v2523 = vpack.c.bf16 %v2494, %v2493
      %v2524 = vpack.c.bf16 %v2496, %v2495
      %v2525 = vpack.c.bf16 %v2498, %v2497
      %v2526 = vpack.c.bf16 %v2500, %v2499
      %v2527 = vpack.c.bf16 %v2502, %v2501
      %v2528 = vpack.c.bf16 %v2504, %v2503
      %v2529 = vpack.c.bf16 %v2506, %v2505
      %v2530 = vpack.c.bf16 %v2508, %v2507
      %v2531 = vpack.c.bf16 %v2510, %v2509
      %v2532 = vpack.c.bf16 %v2512, %v2511
      %v2533 = vpack.c.bf16 %v2514, %v2513
      %v2534 = vpack.c.bf16 %v2516, %v2515
      %v2553 = vunpack.c.l.b16 %v2517
      %v2554 = vunpack.c.h.b16 %v2517
      %v2555 = vunpack.c.l.b16 %v2518
      %v2556 = vunpack.c.h.b16 %v2518
      %v2557 = vunpack.c.l.b16 %v2519
      %v2558 = vunpack.c.h.b16 %v2519
      %v2559 = vunpack.c.l.b16 %v2520
      %v2560 = vunpack.c.h.b16 %v2520
      %v2561 = vunpack.c.l.b16 %v2521
      %v2562 = vunpack.c.h.b16 %v2521
      %v2563 = vunpack.c.l.b16 %v2522
      %v2564 = vunpack.c.h.b16 %v2522
      %v2565 = vunpack.c.l.b16 %v2523
      %v2566 = vunpack.c.h.b16 %v2523
      %v2567 = vunpack.c.l.b16 %v2524
      %v2568 = vunpack.c.h.b16 %v2524
      %v2569 = vunpack.c.l.b16 %v2525
      %v2570 = vunpack.c.h.b16 %v2525
      %v2571 = vunpack.c.l.b16 %v2526
      %v2572 = vunpack.c.h.b16 %v2526
      %v2573 = vunpack.c.l.b16 %v2527
      %v2574 = vunpack.c.h.b16 %v2527
      %v2575 = vunpack.c.l.b16 %v2528
      %v2576 = vunpack.c.h.b16 %v2528
      %v2577 = vunpack.c.l.b16 %v2529
      %v2578 = vunpack.c.h.b16 %v2529
      %v2579 = vunpack.c.l.b16 %v2530
      %v2580 = vunpack.c.h.b16 %v2530
      %v2581 = vunpack.c.l.b16 %v2531
      %v2582 = vunpack.c.h.b16 %v2531
      %v2583 = vunpack.c.l.b16 %v2532
      %v2584 = vunpack.c.h.b16 %v2532
      %v2585 = vunpack.c.l.b16 %v2533
      %v2586 = vunpack.c.h.b16 %v2533
      %v2587 = vunpack.c.l.b16 %v2534
      %v2588 = vunpack.c.h.b16 %v2534
      %v2589 = vpack.c.b16 %v2553, %v2553
      %v2590 = vpack.c.b16 %v2554, %v2554
      %v2591 = vpack.c.b16 %v2555, %v2555
      %v2592 = vpack.c.b16 %v2556, %v2556
      %v2593 = vpack.c.b16 %v2557, %v2557
      %v2594 = vpack.c.b16 %v2558, %v2558
      %v2595 = vpack.c.b16 %v2559, %v2559
      %v2596 = vpack.c.b16 %v2560, %v2560
      %v2597 = vpack.c.b16 %v2561, %v2561
      %v2598 = vpack.c.b16 %v2562, %v2562
      %v2599 = vpack.c.b16 %v2563, %v2563
      %v2600 = vpack.c.b16 %v2564, %v2564
      %v2601 = vpack.c.b16 %v2565, %v2565
      %v2602 = vpack.c.b16 %v2566, %v2566
      %v2603 = vpack.c.b16 %v2567, %v2567
      %v2604 = vpack.c.b16 %v2568, %v2568
      %v2605 = vpack.c.b16 %v2569, %v2569
      %v2606 = vpack.c.b16 %v2570, %v2570
      %v2607 = vpack.c.b16 %v2571, %v2571
      %v2608 = vpack.c.b16 %v2572, %v2572
      %v2609 = vpack.c.b16 %v2573, %v2573
      %v2610 = vpack.c.b16 %v2574, %v2574
      %v2611 = vpack.c.b16 %v2575, %v2575
      %v2612 = vpack.c.b16 %v2576, %v2576
      %v2613 = vpack.c.b16 %v2577, %v2577
      %v2614 = vpack.c.b16 %v2578, %v2578
      %v2615 = vpack.c.b16 %v2579, %v2579
      %v2616 = vpack.c.b16 %v2580, %v2580
      %v2617 = vpack.c.b16 %v2581, %v2581
      %v2618 = vpack.c.b16 %v2582, %v2582
      %v2619 = vpack.c.b16 %v2583, %v2583
      %v2620 = vpack.c.b16 %v2584, %v2584
      %v2621 = vpack.c.b16 %v2585, %v2585
      %v2622 = vpack.c.b16 %v2586, %v2586
      %v2623 = vpack.c.b16 %v2587, %v2587
      %v2624 = vpack.c.b16 %v2588, %v2588
      %2661 = vst [vmem:[%s278] sm:$0xf] %v2589
      %2662 = vst [vmem:[%s278 + $0x4] sm:$0xf] %v2590
      %2663 = vst [vmem:[%s278 + $0x8] sm:$0xf] %v2591
      %2664 = vst [vmem:[%s278 + $0xc] sm:$0xf] %v2592
      %2665 = vst [vmem:[%s278 + $0x10] sm:$0xf] %v2593
      %2666 = vst [vmem:[%s278 + $0x14] sm:$0xf] %v2594
      %2667 = vst [vmem:[%s278 + $0x18] sm:$0xf] %v2595
      %2668 = vst [vmem:[%s278 + $0x1c] sm:$0xf] %v2596
      %2669 = vst [vmem:[%s278 + $0x20] sm:$0xf] %v2597
      %2670 = vst [vmem:[%s278 + $0x24] sm:$0xf] %v2598
      %2671 = vst [vmem:[%s278 + $0x28] sm:$0xf] %v2599
      %2672 = vst [vmem:[%s278 + $0x2c] sm:$0xf] %v2600
      %2673 = vst [vmem:[%s278 + $0x30] sm:$0xf] %v2601
      %2674 = vst [vmem:[%s278 + $0x34] sm:$0xf] %v2602
      %2675 = vst [vmem:[%s278 + $0x38] sm:$0xf] %v2603
      %2676 = vst [vmem:[%s278 + $0x3c] sm:$0xf] %v2604
      %2677 = vst [vmem:[%s278 + $0x40] sm:$0xf] %v2605
      %2678 = vst [vmem:[%s278 + $0x44] sm:$0xf] %v2606
      %2679 = vst [vmem:[%s278 + $0x48] sm:$0xf] %v2607
      %2680 = vst [vmem:[%s278 + $0x4c] sm:$0xf] %v2608
      %2681 = vst [vmem:[%s278 + $0x50] sm:$0xf] %v2609
      %2682 = vst [vmem:[%s278 + $0x54] sm:$0xf] %v2610
      %2683 = vst [vmem:[%s278 + $0x58] sm:$0xf] %v2611
      %2684 = vst [vmem:[%s278 + $0x5c] sm:$0xf] %v2612
      %2685 = vst [vmem:[%s278 + $0x60] sm:$0xf] %v2613
      %2686 = vst [vmem:[%s278 + $0x64] sm:$0xf] %v2614
      %2687 = vst [vmem:[%s278 + $0x68] sm:$0xf] %v2615
      %2688 = vst [vmem:[%s278 + $0x6c] sm:$0xf] %v2616
      %2689 = vst [vmem:[%s278 + $0x70] sm:$0xf] %v2617
      %2690 = vst [vmem:[%s278 + $0x74] sm:$0xf] %v2618
      %2691 = vst [vmem:[%s278 + $0x78] sm:$0xf] %v2619
      %2692 = vst [vmem:[%s278 + $0x7c] sm:$0xf] %v2620
      %2693 = vst [vmem:[%s278 + $0x80] sm:$0xf] %v2621
      %2694 = vst [vmem:[%s278 + $0x84] sm:$0xf] %v2622
      %2695 = vst [vmem:[%s278 + $0x88] sm:$0xf] %v2623
      %2696 = vst [vmem:[%s278 + $0x8c] sm:$0xf] %v2624
      %s2697 = smul.u32 36, %s19
      %p2698 = scmp.lt.s32.totalorder %s18, 1
      %s2699 = scalar_select %p2698, %s18, 1
      %p2700 = scmp.lt.s32.totalorder %s2697, 35
      %s2701 = scalar_select %p2700, %s2697, 35
      %s2702 = smul.addr %s2699, 36
      %s2703 = sadd.s32 %s2701, %s2702
      %s2704 = smul.addr %s2703, 4
      %s2705 = scalar_lea.vmem %s3, %s2704
      // Predicated region
      $region33: #{basic_conv.1} parent=31 // pred_check
        %p2706 = pneg %p127
      $region34: #{basic_conv.1} parent=31 // pred_check_branch
        %2708 = sbr.rel (%p2706) target = $region36
      $region35: #{basic_conv.1} parent=31 // pred_region
        %s2709 = smul.u32 36, %s19
      $region36: #{basic_conv.1} parent=31 // pred_fallthru
        _
    $region32: #{basic_conv.1} parent=5 // pred_fallthru
      _
    %p2710 = scmp.le.s32.totalorder 2, %s9
    // Predicated region
    $region37: #{basic_conv.1} parent=5 // pred_check
      %p2711 = pneg %p2710
    $region38: #{basic_conv.1} parent=5 // pred_check_branch
      %2713 = sbr.rel (%p2711) target = $region40
    $region39: #{basic_conv.1} parent=5 // pred_region
      %s2714 = ssub.s32 %s9, 2
      // Predicated region
      $region41: #{basic_conv.1} parent=39 // pred_check
        %p2715 = pneg %p133
      $region42: #{basic_conv.1} parent=39 // pred_check_branch
        %2717 = sbr.rel (%p2715) target = $region44
      $region43: #{basic_conv.1} parent=39 // pred_region
        %s2718 = smul.u32 36, %s21
        %p2719 = scmp.lt.s32.totalorder %s20, 1
        %s2720 = scalar_select %p2719, %s20, 1
        %p2721 = scmp.lt.s32.totalorder %s2718, 35
        %s2722 = scalar_select %p2721, %s2718, 35
        %s2723 = smul.addr %s2720, 36
        %s2724 = sadd.s32 %s2722, %s2723
        %s2725 = smul.addr %s2724, 4
        %s2726 = scalar_lea.vmem %s3, %s2725
      $region44: #{basic_conv.1} parent=39 // pred_fallthru
        _
    $region40: #{basic_conv.1} parent=5 // pred_fallthru
      _
  $region6: #{basic_conv.1} parent=0 // loop_footer
    %s13 = sadd.s32 1, %s9
  $region7: #{basic_conv.1} parent=0 // loop_footer_branch
    %8 = sbr.rel target = $region3
  $region8: #{basic_conv.1} parent=0 // loop_exit
    _

</llo_original>
